<compile_context>
chip_gen: v7x
topology: tpu7x:2x2x1
jax: 0.10.0
libtpu: 0.0.40
codegen_flags: <defaults>
</compile_context>

<pallas_src>
import functools

import jax
import jax.numpy as jnp
from jax.experimental import pallas as pl
from jax.experimental.pallas import tpu as pltpu

VOCAB = 128        # vocabulary size
HIDDEN = 128       # RNN hidden size
SEQ_LEN = 8        # question length
MAX_SEQ_LEN = 8    # decoded answer length
BOS_TOKEN = 1


def _seq2seq_kernel(q_ref,          # VMEM (bb, SEQ_LEN) int32 : question token ids
                    enc_stack_ref,  # VMEM (V+H, H) bf16 : vstack(emb@We_x+be, We_h)
                    dec_stack_ref,  # VMEM (V+H, H) bf16 : vstack(emb@Wd_x+bd, Wd_h)
                    wo_ref,         # VMEM (H, V) bf16   : output projection
                    bo_ref,         # VMEM (1, V) f32    : output bias
                    out_ref):       # VMEM (bb, MAX_SEQ_LEN) int32 : decoded answers
    bb, seq_len = q_ref.shape
    stack_rows, hidden = enc_stack_ref.shape
    vocab = stack_rows - hidden
    max_seq_len = out_ref.shape[1]
    f32 = jnp.float32
    bf16 = jnp.bfloat16

    vocab_iota = jax.lax.broadcasted_iota(jnp.int32, (bb, vocab), 1)
    q = q_ref[...]                                  # (bb, seq_len) int32

    # ---------------- encoder -------------------------------------------------
    # One fused matmul per step: [one_hot_t | h] @ [enc_tab ; We_h].
    # The one-hots depend only on q, so their construction is off the chain.
    enc_stack = enc_stack_ref[...]                  # loaded at point of use
    h = jnp.zeros((bb, hidden), f32)
    for t in range(seq_len):
        onehot = (vocab_iota == q[:, t:t + 1]).astype(bf16)          # (bb, V)
        lhs = jnp.concatenate([onehot, h.astype(bf16)], axis=-1)     # (bb, V+H)
        h = jnp.tanh(jnp.dot(lhs, enc_stack, preferred_element_type=f32))

    # ---------------- decoder: greedy (argmax) sampling -----------------------
    # TODO(synk): only the "greedy" sampling strategy is implemented in-kernel.
    dec_stack = dec_stack_ref[...]                  # decoder weights loaded late
    wo = dec_stack_ref.dtype and wo_ref[...]        # (H, V) bf16
    bo = bo_ref[...]                                # (1, V) f32
    col_iota = jax.lax.broadcasted_iota(jnp.int32, (bb, max_seq_len), 1)

    onehot = (vocab_iota == BOS_TOKEN).astype(bf16)                  # BOS one-hot
    ans = jnp.zeros((bb, max_seq_len), jnp.int32)
    for t in range(max_seq_len):
        lhs = jnp.concatenate([onehot, h.astype(bf16)], axis=-1)     # (bb, V+H)
        h = jnp.tanh(jnp.dot(lhs, dec_stack, preferred_element_type=f32))
        logits = jnp.dot(h.astype(bf16), wo, preferred_element_type=f32) + bo
        m = jnp.max(logits, axis=-1, keepdims=True)                  # on-chain max
        eq = logits == m
        # Reuse the equality mask as the next step's one-hot (exact logit ties
        # are measure-zero with continuous float logits).
        onehot = eq.astype(bf16)
        # Token-id extraction only feeds the output -> off the recurrent chain.
        tok = jnp.min(jnp.where(eq, vocab_iota, vocab), axis=-1, keepdims=True)
        tok = jnp.minimum(tok, vocab - 1).astype(jnp.int32)   # NaN-sentinel guard
        ans = jnp.where(col_iota == t, tok, ans)
    out_ref[...] = ans                                          # single full store


def _pack_params(raw):
    """Pre-compose embedding with input projections, fold biases, stack with W_h."""
    emb, we_x, we_h, be, wd_x, wd_h, bd, wo, bo = raw
    enc_tab = emb @ we_x + be                              # (VOCAB, HIDDEN) f32
    dec_tab = emb @ wd_x + bd                              # (VOCAB, HIDDEN) f32
    enc_stack = jnp.concatenate([enc_tab, we_h], axis=0).astype(jnp.bfloat16)
    dec_stack = jnp.concatenate([dec_tab, wd_h], axis=0).astype(jnp.bfloat16)
    return (enc_stack, dec_stack, wo.astype(jnp.bfloat16), bo.astype(jnp.float32))


def _round_up(x, m):
    return ((x + m - 1) // m) * m


@functools.partial(jax.jit, static_argnames=("max_seq_len",))
def _seq2seq_predict_batched(questions, packed, max_seq_len):
    """All questions -> all answers in a single pallas_call."""
    enc_stack, dec_stack, wo, bo = packed
    b, seq_len = questions.shape
    stack_rows, hidden = enc_stack.shape
    vocab = stack_rows - hidden

    # Adaptive batch block: small batches -> one round_up(b,8) block;
    # big batches -> 128-row blocks (fills MXU rows, >=2 parallel blocks).
    b8 = _round_up(b, 8)
    bb = b8 if b8 <= 128 else 128
    b_pad = _round_up(b, bb)
    q = jnp.zeros((b_pad, seq_len), jnp.int32).at[:b].set(
        questions.astype(jnp.int32))

    full = lambda shape: pl.BlockSpec(shape, lambda i: (0, 0))
    out = pl.pallas_call(
        _seq2seq_kernel,
        out_shape=jax.ShapeDtypeStruct((b_pad, max_seq_len), jnp.int32),
        grid_spec=pltpu.PrefetchScalarGridSpec(
            num_scalar_prefetch=0,
            grid=(b_pad // bb,),
            in_specs=[
                pl.BlockSpec((bb, seq_len), lambda i: (i, 0)),
                full((stack_rows, hidden)),   # enc_stack
                full((stack_rows, hidden)),   # dec_stack
                full((hidden, vocab)),        # wo
                full((1, vocab)),             # bo
            ],
            out_specs=pl.BlockSpec((bb, max_seq_len), lambda i: (i, 0)),
        ),
        compiler_params=pltpu.CompilerParams(
            dimension_semantics=("parallel",)),   # batch axis -> both v7x TCs
    )(q, enc_stack, dec_stack, wo, bo)
    return out[:b]


def make_seq2seq_predict_model(params):
    """Synthetic Seq2SeqPredict: list of questions -> list of answers."""
    packed = _pack_params(params)

    def model(questions, sampling_strategy, max_seq_len):
        assert sampling_strategy == "greedy", "only greedy sampling implemented"
        q = jnp.stack([jnp.asarray(x, jnp.int32) for x in questions], axis=0)
        answers = _seq2seq_predict_batched(q, packed, max_seq_len)
        return [answers[i] for i in range(len(questions))]

    return model


class ModelDecorator:
    """Mirror of the PyTorch ModelDecorator: pack question into a list,
    call the inner model, unpack the single answer."""

    def __init__(self, model):
        self.model = model

    def __call__(self, question, sampling_strategy, max_seq_len):
        return self.model([question], sampling_strategy, max_seq_len)[0]


def _init_params(key):
    ks = jax.random.split(key, 9)
    scale = 0.1
    emb = scale * jax.random.normal(ks[0], (VOCAB, HIDDEN), jnp.float32)
    we_x = scale * jax.random.normal(ks[1], (HIDDEN, HIDDEN), jnp.float32)
    we_h = scale * jax.random.normal(ks[2], (HIDDEN, HIDDEN), jnp.float32)
    be = scale * jax.random.normal(ks[3], (1, HIDDEN), jnp.float32)
    wd_x = scale * jax.random.normal(ks[4], (HIDDEN, HIDDEN), jnp.float32)
    wd_h = scale * jax.random.normal(ks[5], (HIDDEN, HIDDEN), jnp.float32)
    bd = scale * jax.random.normal(ks[6], (1, HIDDEN), jnp.float32)
    wo = scale * jax.random.normal(ks[7], (HIDDEN, VOCAB), jnp.float32)
    bo = scale * jax.random.normal(ks[8], (1, VOCAB), jnp.float32)
    return (emb, we_x, we_h, be, wd_x, wd_h, bd, wo, bo)


if __name__ == "__main__":
    key = jax.random.PRNGKey(0)
    pkey, qkey = jax.random.split(key)
    params = _init_params(pkey)

    # deterministic small "question": SEQ_LEN token ids in [0, VOCAB)
    question = jax.random.randint(qkey, (SEQ_LEN,), 0, VOCAB, dtype=jnp.int32)

    model = make_seq2seq_predict_model(params)
    decorated = ModelDecorator(model)

    answer = decorated(question, sampling_strategy="greedy",
                       max_seq_len=MAX_SEQ_LEN)
    answer = jax.block_until_ready(answer)
    assert answer.shape == (MAX_SEQ_LEN,) and answer.dtype == jnp.int32

    # also exercise the batched path directly (multiple questions, one launch)
    q2 = jax.random.randint(jax.random.PRNGKey(1), (3, SEQ_LEN), 0, VOCAB,
                            dtype=jnp.int32)
    answers = model([q2[i] for i in range(3)], "greedy", MAX_SEQ_LEN)
    jax.block_until_ready(answers[-1])
    assert all(a.shape == (MAX_SEQ_LEN,) for a in answers)

    print("KERNEL_OK")
</pallas_src>

<mosaic_0001>
module attributes {stable_mosaic.version = 11 : i64} {
  func.func @_seq2seq_kernel(%arg0: i32, %arg1: memref<8x8xi32, #tpu.memory_space<vmem>>, %arg2: memref<256x128xbf16, #tpu.memory_space<vmem>>, %arg3: memref<256x128xbf16, #tpu.memory_space<vmem>>, %arg4: memref<128x128xbf16, #tpu.memory_space<vmem>>, %arg5: memref<1x128xf32, #tpu.memory_space<vmem>>, %arg6: memref<8x8xi32, #tpu.memory_space<vmem>>) attributes {dimension_semantics = [#tpu.dimension_semantics<parallel>], iteration_bounds = array<i64: 1>, scalar_prefetch = 0 : i64, scratch_operands = 0 : i64, tpu.core_type = #tpu.core_type<tc>, window_params = [{transform_indices = @transform_0, window_bounds = array<i64: 8, 8>}, {pipeline_mode = #tpu.pipeline_mode<synchronous>, transform_indices = @transform_1, window_bounds = array<i64: 256, 128>}, {pipeline_mode = #tpu.pipeline_mode<synchronous>, transform_indices = @transform_2, window_bounds = array<i64: 256, 128>}, {pipeline_mode = #tpu.pipeline_mode<synchronous>, transform_indices = @transform_3, window_bounds = array<i64: 128, 128>}, {pipeline_mode = #tpu.pipeline_mode<synchronous>, transform_indices = @transform_4, window_bounds = array<i64: 1, 128>}, {transform_indices = @transform_5, window_bounds = array<i64: 8, 8>}]} {
    %0 = tpu.iota {dimensions = array<i32: 1>} : vector<8x128xi32>
    %c0 = arith.constant 0 : index
    %c0_0 = arith.constant 0 : index
    %1 = vector.load %arg1[%c0, %c0_0] : memref<8x8xi32, #tpu.memory_space<vmem>>, vector<8x8xi32>
    %c0_1 = arith.constant 0 : index
    %c0_2 = arith.constant 0 : index
    %2 = vector.load %arg2[%c0_1, %c0_2] : memref<256x128xbf16, #tpu.memory_space<vmem>>, vector<256x128xbf16>
    %cst = arith.constant 0.000000e+00 : f32
    %3 = vector.broadcast %cst : f32 to vector<8x128xf32>
    %4 = vector.extract_strided_slice %1 {offsets = [0, 0], sizes = [8, 1], strides = [1, 1]} : vector<8x8xi32> to vector<8x1xi32>
    %5 = vector.broadcast %4 : vector<8x1xi32> to vector<8x128xi32>
    %6 = arith.cmpi eq, %0, %5 : vector<8x128xi32>
    %7 = arith.extui %6 : vector<8x128xi1> to vector<8x128xi32>
    %8 = arith.sitofp %7 : vector<8x128xi32> to vector<8x128xf32>
    %9 = arith.truncf %8 : vector<8x128xf32> to vector<8x128xbf16>
    %10 = arith.truncf %3 : vector<8x128xf32> to vector<8x128xbf16>
    %11 = tpu.concatenate %9, %10 in 1 : vector<8x128xbf16>, vector<8x128xbf16> -> vector<8x256xbf16>
    %cst_3 = arith.constant dense<0.000000e+00> : vector<8x128xf32>
    %12 = tpu.matmul %11, %2, %cst_3 {dimension_numbers = #tpu.dot_dimension_numbers<[1], [0], [0], [1], [0, 0, 1, 1], [], []>} : vector<8x256xbf16>, vector<256x128xbf16>, vector<8x128xf32> -> vector<8x128xf32>
    %13 = math.tanh %12 : vector<8x128xf32>
    %14 = vector.extract_strided_slice %1 {offsets = [0, 1], sizes = [8, 1], strides = [1, 1]} : vector<8x8xi32> to vector<8x1xi32>
    %15 = vector.broadcast %14 : vector<8x1xi32> to vector<8x128xi32>
    %16 = arith.cmpi eq, %0, %15 : vector<8x128xi32>
    %17 = arith.extui %16 : vector<8x128xi1> to vector<8x128xi32>
    %18 = arith.sitofp %17 : vector<8x128xi32> to vector<8x128xf32>
    %19 = arith.truncf %18 : vector<8x128xf32> to vector<8x128xbf16>
    %20 = arith.truncf %13 : vector<8x128xf32> to vector<8x128xbf16>
    %21 = tpu.concatenate %19, %20 in 1 : vector<8x128xbf16>, vector<8x128xbf16> -> vector<8x256xbf16>
    %cst_4 = arith.constant dense<0.000000e+00> : vector<8x128xf32>
    %22 = tpu.matmul %21, %2, %cst_4 {dimension_numbers = #tpu.dot_dimension_numbers<[1], [0], [0], [1], [0, 0, 1, 1], [], []>} : vector<8x256xbf16>, vector<256x128xbf16>, vector<8x128xf32> -> vector<8x128xf32>
    %23 = math.tanh %22 : vector<8x128xf32>
    %24 = vector.extract_strided_slice %1 {offsets = [0, 2], sizes = [8, 1], strides = [1, 1]} : vector<8x8xi32> to vector<8x1xi32>
    %25 = vector.broadcast %24 : vector<8x1xi32> to vector<8x128xi32>
    %26 = arith.cmpi eq, %0, %25 : vector<8x128xi32>
    %27 = arith.extui %26 : vector<8x128xi1> to vector<8x128xi32>
    %28 = arith.sitofp %27 : vector<8x128xi32> to vector<8x128xf32>
    %29 = arith.truncf %28 : vector<8x128xf32> to vector<8x128xbf16>
    %30 = arith.truncf %23 : vector<8x128xf32> to vector<8x128xbf16>
    %31 = tpu.concatenate %29, %30 in 1 : vector<8x128xbf16>, vector<8x128xbf16> -> vector<8x256xbf16>
    %cst_5 = arith.constant dense<0.000000e+00> : vector<8x128xf32>
    %32 = tpu.matmul %31, %2, %cst_5 {dimension_numbers = #tpu.dot_dimension_numbers<[1], [0], [0], [1], [0, 0, 1, 1], [], []>} : vector<8x256xbf16>, vector<256x128xbf16>, vector<8x128xf32> -> vector<8x128xf32>
    %33 = math.tanh %32 : vector<8x128xf32>
    %34 = vector.extract_strided_slice %1 {offsets = [0, 3], sizes = [8, 1], strides = [1, 1]} : vector<8x8xi32> to vector<8x1xi32>
    %35 = vector.broadcast %34 : vector<8x1xi32> to vector<8x128xi32>
    %36 = arith.cmpi eq, %0, %35 : vector<8x128xi32>
    %37 = arith.extui %36 : vector<8x128xi1> to vector<8x128xi32>
    %38 = arith.sitofp %37 : vector<8x128xi32> to vector<8x128xf32>
    %39 = arith.truncf %38 : vector<8x128xf32> to vector<8x128xbf16>
    %40 = arith.truncf %33 : vector<8x128xf32> to vector<8x128xbf16>
    %41 = tpu.concatenate %39, %40 in 1 : vector<8x128xbf16>, vector<8x128xbf16> -> vector<8x256xbf16>
    %cst_6 = arith.constant dense<0.000000e+00> : vector<8x128xf32>
    %42 = tpu.matmul %41, %2, %cst_6 {dimension_numbers = #tpu.dot_dimension_numbers<[1], [0], [0], [1], [0, 0, 1, 1], [], []>} : vector<8x256xbf16>, vector<256x128xbf16>, vector<8x128xf32> -> vector<8x128xf32>
    %43 = math.tanh %42 : vector<8x128xf32>
    %44 = vector.extract_strided_slice %1 {offsets = [0, 4], sizes = [8, 1], strides = [1, 1]} : vector<8x8xi32> to vector<8x1xi32>
    %45 = vector.broadcast %44 : vector<8x1xi32> to vector<8x128xi32>
    %46 = arith.cmpi eq, %0, %45 : vector<8x128xi32>
    %47 = arith.extui %46 : vector<8x128xi1> to vector<8x128xi32>
    %48 = arith.sitofp %47 : vector<8x128xi32> to vector<8x128xf32>
    %49 = arith.truncf %48 : vector<8x128xf32> to vector<8x128xbf16>
    %50 = arith.truncf %43 : vector<8x128xf32> to vector<8x128xbf16>
    %51 = tpu.concatenate %49, %50 in 1 : vector<8x128xbf16>, vector<8x128xbf16> -> vector<8x256xbf16>
    %cst_7 = arith.constant dense<0.000000e+00> : vector<8x128xf32>
    %52 = tpu.matmul %51, %2, %cst_7 {dimension_numbers = #tpu.dot_dimension_numbers<[1], [0], [0], [1], [0, 0, 1, 1], [], []>} : vector<8x256xbf16>, vector<256x128xbf16>, vector<8x128xf32> -> vector<8x128xf32>
    %53 = math.tanh %52 : vector<8x128xf32>
    %54 = vector.extract_strided_slice %1 {offsets = [0, 5], sizes = [8, 1], strides = [1, 1]} : vector<8x8xi32> to vector<8x1xi32>
    %55 = vector.broadcast %54 : vector<8x1xi32> to vector<8x128xi32>
    %56 = arith.cmpi eq, %0, %55 : vector<8x128xi32>
    %57 = arith.extui %56 : vector<8x128xi1> to vector<8x128xi32>
    %58 = arith.sitofp %57 : vector<8x128xi32> to vector<8x128xf32>
    %59 = arith.truncf %58 : vector<8x128xf32> to vector<8x128xbf16>
    %60 = arith.truncf %53 : vector<8x128xf32> to vector<8x128xbf16>
    %61 = tpu.concatenate %59, %60 in 1 : vector<8x128xbf16>, vector<8x128xbf16> -> vector<8x256xbf16>
    %cst_8 = arith.constant dense<0.000000e+00> : vector<8x128xf32>
    %62 = tpu.matmul %61, %2, %cst_8 {dimension_numbers = #tpu.dot_dimension_numbers<[1], [0], [0], [1], [0, 0, 1, 1], [], []>} : vector<8x256xbf16>, vector<256x128xbf16>, vector<8x128xf32> -> vector<8x128xf32>
    %63 = math.tanh %62 : vector<8x128xf32>
    %64 = vector.extract_strided_slice %1 {offsets = [0, 6], sizes = [8, 1], strides = [1, 1]} : vector<8x8xi32> to vector<8x1xi32>
    %65 = vector.broadcast %64 : vector<8x1xi32> to vector<8x128xi32>
    %66 = arith.cmpi eq, %0, %65 : vector<8x128xi32>
    %67 = arith.extui %66 : vector<8x128xi1> to vector<8x128xi32>
    %68 = arith.sitofp %67 : vector<8x128xi32> to vector<8x128xf32>
    %69 = arith.truncf %68 : vector<8x128xf32> to vector<8x128xbf16>
    %70 = arith.truncf %63 : vector<8x128xf32> to vector<8x128xbf16>
    %71 = tpu.concatenate %69, %70 in 1 : vector<8x128xbf16>, vector<8x128xbf16> -> vector<8x256xbf16>
    %cst_9 = arith.constant dense<0.000000e+00> : vector<8x128xf32>
    %72 = tpu.matmul %71, %2, %cst_9 {dimension_numbers = #tpu.dot_dimension_numbers<[1], [0], [0], [1], [0, 0, 1, 1], [], []>} : vector<8x256xbf16>, vector<256x128xbf16>, vector<8x128xf32> -> vector<8x128xf32>
    %73 = math.tanh %72 : vector<8x128xf32>
    %74 = vector.extract_strided_slice %1 {offsets = [0, 7], sizes = [8, 1], strides = [1, 1]} : vector<8x8xi32> to vector<8x1xi32>
    %75 = vector.broadcast %74 : vector<8x1xi32> to vector<8x128xi32>
    %76 = arith.cmpi eq, %0, %75 : vector<8x128xi32>
    %77 = arith.extui %76 : vector<8x128xi1> to vector<8x128xi32>
    %78 = arith.sitofp %77 : vector<8x128xi32> to vector<8x128xf32>
    %79 = arith.truncf %78 : vector<8x128xf32> to vector<8x128xbf16>
    %80 = arith.truncf %73 : vector<8x128xf32> to vector<8x128xbf16>
    %81 = tpu.concatenate %79, %80 in 1 : vector<8x128xbf16>, vector<8x128xbf16> -> vector<8x256xbf16>
    %cst_10 = arith.constant dense<0.000000e+00> : vector<8x128xf32>
    %82 = tpu.matmul %81, %2, %cst_10 {dimension_numbers = #tpu.dot_dimension_numbers<[1], [0], [0], [1], [0, 0, 1, 1], [], []>} : vector<8x256xbf16>, vector<256x128xbf16>, vector<8x128xf32> -> vector<8x128xf32>
    %83 = math.tanh %82 : vector<8x128xf32>
    %c0_11 = arith.constant 0 : index
    %c0_12 = arith.constant 0 : index
    %84 = vector.load %arg3[%c0_11, %c0_12] : memref<256x128xbf16, #tpu.memory_space<vmem>>, vector<256x128xbf16>
    %c0_13 = arith.constant 0 : index
    %c0_14 = arith.constant 0 : index
    %85 = vector.load %arg4[%c0_13, %c0_14] : memref<128x128xbf16, #tpu.memory_space<vmem>>, vector<128x128xbf16>
    %c0_15 = arith.constant 0 : index
    %c0_16 = arith.constant 0 : index
    %86 = vector.load %arg5[%c0_15, %c0_16] : memref<1x128xf32, #tpu.memory_space<vmem>>, vector<1x128xf32>
    %87 = tpu.iota {dimensions = array<i32: 1>} : vector<8x8xi32>
    %c1_i32 = arith.constant 1 : i32
    %88 = vector.broadcast %c1_i32 : i32 to vector<8x128xi32>
    %89 = arith.cmpi eq, %0, %88 : vector<8x128xi32>
    %90 = arith.extui %89 : vector<8x128xi1> to vector<8x128xi32>
    %91 = arith.sitofp %90 : vector<8x128xi32> to vector<8x128xf32>
    %92 = arith.truncf %91 : vector<8x128xf32> to vector<8x128xbf16>
    %c0_i32 = arith.constant 0 : i32
    %93 = vector.broadcast %c0_i32 : i32 to vector<8x8xi32>
    %94 = arith.truncf %83 : vector<8x128xf32> to vector<8x128xbf16>
    %95 = tpu.concatenate %92, %94 in 1 : vector<8x128xbf16>, vector<8x128xbf16> -> vector<8x256xbf16>
    %cst_17 = arith.constant dense<0.000000e+00> : vector<8x128xf32>
    %96 = tpu.matmul %95, %84, %cst_17 {dimension_numbers = #tpu.dot_dimension_numbers<[1], [0], [0], [1], [0, 0, 1, 1], [], []>} : vector<8x256xbf16>, vector<256x128xbf16>, vector<8x128xf32> -> vector<8x128xf32>
    %97 = math.tanh %96 : vector<8x128xf32>
    %98 = arith.truncf %97 : vector<8x128xf32> to vector<8x128xbf16>
    %cst_18 = arith.constant dense<0.000000e+00> : vector<8x128xf32>
    %99 = tpu.matmul %98, %85, %cst_18 {dimension_numbers = #tpu.dot_dimension_numbers<[1], [0], [0], [1], [0, 0, 1, 1], [], []>} : vector<8x128xbf16>, vector<128x128xbf16>, vector<8x128xf32> -> vector<8x128xf32>
    %100 = vector.broadcast %86 : vector<1x128xf32> to vector<8x128xf32>
    %101 = arith.addf %99, %100 : vector<8x128xf32>
    %cst_19 = arith.constant dense<0xFF800000> : vector<8xf32>
    %102 = vector.multi_reduction <maximumf>, %101, %cst_19 [1] : vector<8x128xf32> to vector<8xf32>
    %103 = vector.shape_cast %102 : vector<8xf32> to vector<8x1xf32>
    %104 = vector.broadcast %103 : vector<8x1xf32> to vector<8x128xf32>
    %105 = arith.cmpf oeq, %101, %104 : vector<8x128xf32>
    %106 = arith.extui %105 : vector<8x128xi1> to vector<8x128xi32>
    %107 = arith.sitofp %106 : vector<8x128xi32> to vector<8x128xf32>
    %108 = arith.truncf %107 : vector<8x128xf32> to vector<8x128xbf16>
    %c128_i32 = arith.constant 128 : i32
    %109 = vector.broadcast %c128_i32 : i32 to vector<8x128xi32>
    %110 = arith.select %105, %0, %109 : vector<8x128xi1>, vector<8x128xi32>
    %cst_20 = arith.constant dense<2147483647> : vector<8xi32>
    %111 = vector.multi_reduction <minsi>, %110, %cst_20 [1] : vector<8x128xi32> to vector<8xi32>
    %112 = vector.shape_cast %111 : vector<8xi32> to vector<8x1xi32>
    %c127_i32 = arith.constant 127 : i32
    %113 = vector.broadcast %c127_i32 : i32 to vector<8x1xi32>
    %114 = arith.minsi %112, %113 : vector<8x1xi32>
    %c0_i32_21 = arith.constant 0 : i32
    %115 = vector.broadcast %c0_i32_21 : i32 to vector<8x8xi32>
    %116 = arith.cmpi eq, %87, %115 : vector<8x8xi32>
    %117 = vector.shape_cast %114 : vector<8x1xi32> to vector<8x1xi32>
    %118 = vector.broadcast %117 : vector<8x1xi32> to vector<8x8xi32>
    %119 = arith.select %116, %118, %93 : vector<8x8xi1>, vector<8x8xi32>
    %120 = arith.truncf %97 : vector<8x128xf32> to vector<8x128xbf16>
    %121 = tpu.concatenate %108, %120 in 1 : vector<8x128xbf16>, vector<8x128xbf16> -> vector<8x256xbf16>
    %cst_22 = arith.constant dense<0.000000e+00> : vector<8x128xf32>
    %122 = tpu.matmul %121, %84, %cst_22 {dimension_numbers = #tpu.dot_dimension_numbers<[1], [0], [0], [1], [0, 0, 1, 1], [], []>} : vector<8x256xbf16>, vector<256x128xbf16>, vector<8x128xf32> -> vector<8x128xf32>
    %123 = math.tanh %122 : vector<8x128xf32>
    %124 = arith.truncf %123 : vector<8x128xf32> to vector<8x128xbf16>
    %cst_23 = arith.constant dense<0.000000e+00> : vector<8x128xf32>
    %125 = tpu.matmul %124, %85, %cst_23 {dimension_numbers = #tpu.dot_dimension_numbers<[1], [0], [0], [1], [0, 0, 1, 1], [], []>} : vector<8x128xbf16>, vector<128x128xbf16>, vector<8x128xf32> -> vector<8x128xf32>
    %126 = vector.broadcast %86 : vector<1x128xf32> to vector<8x128xf32>
    %127 = arith.addf %125, %126 : vector<8x128xf32>
    %cst_24 = arith.constant dense<0xFF800000> : vector<8xf32>
    %128 = vector.multi_reduction <maximumf>, %127, %cst_24 [1] : vector<8x128xf32> to vector<8xf32>
    %129 = vector.shape_cast %128 : vector<8xf32> to vector<8x1xf32>
    %130 = vector.broadcast %129 : vector<8x1xf32> to vector<8x128xf32>
    %131 = arith.cmpf oeq, %127, %130 : vector<8x128xf32>
    %132 = arith.extui %131 : vector<8x128xi1> to vector<8x128xi32>
    %133 = arith.sitofp %132 : vector<8x128xi32> to vector<8x128xf32>
    %134 = arith.truncf %133 : vector<8x128xf32> to vector<8x128xbf16>
    %c128_i32_25 = arith.constant 128 : i32
    %135 = vector.broadcast %c128_i32_25 : i32 to vector<8x128xi32>
    %136 = arith.select %131, %0, %135 : vector<8x128xi1>, vector<8x128xi32>
    %cst_26 = arith.constant dense<2147483647> : vector<8xi32>
    %137 = vector.multi_reduction <minsi>, %136, %cst_26 [1] : vector<8x128xi32> to vector<8xi32>
    %138 = vector.shape_cast %137 : vector<8xi32> to vector<8x1xi32>
    %c127_i32_27 = arith.constant 127 : i32
    %139 = vector.broadcast %c127_i32_27 : i32 to vector<8x1xi32>
    %140 = arith.minsi %138, %139 : vector<8x1xi32>
    %c1_i32_28 = arith.constant 1 : i32
    %141 = vector.broadcast %c1_i32_28 : i32 to vector<8x8xi32>
    %142 = arith.cmpi eq, %87, %141 : vector<8x8xi32>
    %143 = vector.shape_cast %140 : vector<8x1xi32> to vector<8x1xi32>
    %144 = vector.broadcast %143 : vector<8x1xi32> to vector<8x8xi32>
    %145 = arith.select %142, %144, %119 : vector<8x8xi1>, vector<8x8xi32>
    %146 = arith.truncf %123 : vector<8x128xf32> to vector<8x128xbf16>
    %147 = tpu.concatenate %134, %146 in 1 : vector<8x128xbf16>, vector<8x128xbf16> -> vector<8x256xbf16>
    %cst_29 = arith.constant dense<0.000000e+00> : vector<8x128xf32>
    %148 = tpu.matmul %147, %84, %cst_29 {dimension_numbers = #tpu.dot_dimension_numbers<[1], [0], [0], [1], [0, 0, 1, 1], [], []>} : vector<8x256xbf16>, vector<256x128xbf16>, vector<8x128xf32> -> vector<8x128xf32>
    %149 = math.tanh %148 : vector<8x128xf32>
    %150 = arith.truncf %149 : vector<8x128xf32> to vector<8x128xbf16>
    %cst_30 = arith.constant dense<0.000000e+00> : vector<8x128xf32>
    %151 = tpu.matmul %150, %85, %cst_30 {dimension_numbers = #tpu.dot_dimension_numbers<[1], [0], [0], [1], [0, 0, 1, 1], [], []>} : vector<8x128xbf16>, vector<128x128xbf16>, vector<8x128xf32> -> vector<8x128xf32>
    %152 = vector.broadcast %86 : vector<1x128xf32> to vector<8x128xf32>
    %153 = arith.addf %151, %152 : vector<8x128xf32>
    %cst_31 = arith.constant dense<0xFF800000> : vector<8xf32>
    %154 = vector.multi_reduction <maximumf>, %153, %cst_31 [1] : vector<8x128xf32> to vector<8xf32>
    %155 = vector.shape_cast %154 : vector<8xf32> to vector<8x1xf32>
    %156 = vector.broadcast %155 : vector<8x1xf32> to vector<8x128xf32>
    %157 = arith.cmpf oeq, %153, %156 : vector<8x128xf32>
    %158 = arith.extui %157 : vector<8x128xi1> to vector<8x128xi32>
    %159 = arith.sitofp %158 : vector<8x128xi32> to vector<8x128xf32>
    %160 = arith.truncf %159 : vector<8x128xf32> to vector<8x128xbf16>
    %c128_i32_32 = arith.constant 128 : i32
    %161 = vector.broadcast %c128_i32_32 : i32 to vector<8x128xi32>
    %162 = arith.select %157, %0, %161 : vector<8x128xi1>, vector<8x128xi32>
    %cst_33 = arith.constant dense<2147483647> : vector<8xi32>
    %163 = vector.multi_reduction <minsi>, %162, %cst_33 [1] : vector<8x128xi32> to vector<8xi32>
    %164 = vector.shape_cast %163 : vector<8xi32> to vector<8x1xi32>
    %c127_i32_34 = arith.constant 127 : i32
    %165 = vector.broadcast %c127_i32_34 : i32 to vector<8x1xi32>
    %166 = arith.minsi %164, %165 : vector<8x1xi32>
    %c2_i32 = arith.constant 2 : i32
    %167 = vector.broadcast %c2_i32 : i32 to vector<8x8xi32>
    %168 = arith.cmpi eq, %87, %167 : vector<8x8xi32>
    %169 = vector.shape_cast %166 : vector<8x1xi32> to vector<8x1xi32>
    %170 = vector.broadcast %169 : vector<8x1xi32> to vector<8x8xi32>
    %171 = arith.select %168, %170, %145 : vector<8x8xi1>, vector<8x8xi32>
    %172 = arith.truncf %149 : vector<8x128xf32> to vector<8x128xbf16>
    %173 = tpu.concatenate %160, %172 in 1 : vector<8x128xbf16>, vector<8x128xbf16> -> vector<8x256xbf16>
    %cst_35 = arith.constant dense<0.000000e+00> : vector<8x128xf32>
    %174 = tpu.matmul %173, %84, %cst_35 {dimension_numbers = #tpu.dot_dimension_numbers<[1], [0], [0], [1], [0, 0, 1, 1], [], []>} : vector<8x256xbf16>, vector<256x128xbf16>, vector<8x128xf32> -> vector<8x128xf32>
    %175 = math.tanh %174 : vector<8x128xf32>
    %176 = arith.truncf %175 : vector<8x128xf32> to vector<8x128xbf16>
    %cst_36 = arith.constant dense<0.000000e+00> : vector<8x128xf32>
    %177 = tpu.matmul %176, %85, %cst_36 {dimension_numbers = #tpu.dot_dimension_numbers<[1], [0], [0], [1], [0, 0, 1, 1], [], []>} : vector<8x128xbf16>, vector<128x128xbf16>, vector<8x128xf32> -> vector<8x128xf32>
    %178 = vector.broadcast %86 : vector<1x128xf32> to vector<8x128xf32>
    %179 = arith.addf %177, %178 : vector<8x128xf32>
    %cst_37 = arith.constant dense<0xFF800000> : vector<8xf32>
    %180 = vector.multi_reduction <maximumf>, %179, %cst_37 [1] : vector<8x128xf32> to vector<8xf32>
    %181 = vector.shape_cast %180 : vector<8xf32> to vector<8x1xf32>
    %182 = vector.broadcast %181 : vector<8x1xf32> to vector<8x128xf32>
    %183 = arith.cmpf oeq, %179, %182 : vector<8x128xf32>
    %184 = arith.extui %183 : vector<8x128xi1> to vector<8x128xi32>
    %185 = arith.sitofp %184 : vector<8x128xi32> to vector<8x128xf32>
    %186 = arith.truncf %185 : vector<8x128xf32> to vector<8x128xbf16>
    %c128_i32_38 = arith.constant 128 : i32
    %187 = vector.broadcast %c128_i32_38 : i32 to vector<8x128xi32>
    %188 = arith.select %183, %0, %187 : vector<8x128xi1>, vector<8x128xi32>
    %cst_39 = arith.constant dense<2147483647> : vector<8xi32>
    %189 = vector.multi_reduction <minsi>, %188, %cst_39 [1] : vector<8x128xi32> to vector<8xi32>
    %190 = vector.shape_cast %189 : vector<8xi32> to vector<8x1xi32>
    %c127_i32_40 = arith.constant 127 : i32
    %191 = vector.broadcast %c127_i32_40 : i32 to vector<8x1xi32>
    %192 = arith.minsi %190, %191 : vector<8x1xi32>
    %c3_i32 = arith.constant 3 : i32
    %193 = vector.broadcast %c3_i32 : i32 to vector<8x8xi32>
    %194 = arith.cmpi eq, %87, %193 : vector<8x8xi32>
    %195 = vector.shape_cast %192 : vector<8x1xi32> to vector<8x1xi32>
    %196 = vector.broadcast %195 : vector<8x1xi32> to vector<8x8xi32>
    %197 = arith.select %194, %196, %171 : vector<8x8xi1>, vector<8x8xi32>
    %198 = arith.truncf %175 : vector<8x128xf32> to vector<8x128xbf16>
    %199 = tpu.concatenate %186, %198 in 1 : vector<8x128xbf16>, vector<8x128xbf16> -> vector<8x256xbf16>
    %cst_41 = arith.constant dense<0.000000e+00> : vector<8x128xf32>
    %200 = tpu.matmul %199, %84, %cst_41 {dimension_numbers = #tpu.dot_dimension_numbers<[1], [0], [0], [1], [0, 0, 1, 1], [], []>} : vector<8x256xbf16>, vector<256x128xbf16>, vector<8x128xf32> -> vector<8x128xf32>
    %201 = math.tanh %200 : vector<8x128xf32>
    %202 = arith.truncf %201 : vector<8x128xf32> to vector<8x128xbf16>
    %cst_42 = arith.constant dense<0.000000e+00> : vector<8x128xf32>
    %203 = tpu.matmul %202, %85, %cst_42 {dimension_numbers = #tpu.dot_dimension_numbers<[1], [0], [0], [1], [0, 0, 1, 1], [], []>} : vector<8x128xbf16>, vector<128x128xbf16>, vector<8x128xf32> -> vector<8x128xf32>
    %204 = vector.broadcast %86 : vector<1x128xf32> to vector<8x128xf32>
    %205 = arith.addf %203, %204 : vector<8x128xf32>
    %cst_43 = arith.constant dense<0xFF800000> : vector<8xf32>
    %206 = vector.multi_reduction <maximumf>, %205, %cst_43 [1] : vector<8x128xf32> to vector<8xf32>
    %207 = vector.shape_cast %206 : vector<8xf32> to vector<8x1xf32>
    %208 = vector.broadcast %207 : vector<8x1xf32> to vector<8x128xf32>
    %209 = arith.cmpf oeq, %205, %208 : vector<8x128xf32>
    %210 = arith.extui %209 : vector<8x128xi1> to vector<8x128xi32>
    %211 = arith.sitofp %210 : vector<8x128xi32> to vector<8x128xf32>
    %212 = arith.truncf %211 : vector<8x128xf32> to vector<8x128xbf16>
    %c128_i32_44 = arith.constant 128 : i32
    %213 = vector.broadcast %c128_i32_44 : i32 to vector<8x128xi32>
    %214 = arith.select %209, %0, %213 : vector<8x128xi1>, vector<8x128xi32>
    %cst_45 = arith.constant dense<2147483647> : vector<8xi32>
    %215 = vector.multi_reduction <minsi>, %214, %cst_45 [1] : vector<8x128xi32> to vector<8xi32>
    %216 = vector.shape_cast %215 : vector<8xi32> to vector<8x1xi32>
    %c127_i32_46 = arith.constant 127 : i32
    %217 = vector.broadcast %c127_i32_46 : i32 to vector<8x1xi32>
    %218 = arith.minsi %216, %217 : vector<8x1xi32>
    %c4_i32 = arith.constant 4 : i32
    %219 = vector.broadcast %c4_i32 : i32 to vector<8x8xi32>
    %220 = arith.cmpi eq, %87, %219 : vector<8x8xi32>
    %221 = vector.shape_cast %218 : vector<8x1xi32> to vector<8x1xi32>
    %222 = vector.broadcast %221 : vector<8x1xi32> to vector<8x8xi32>
    %223 = arith.select %220, %222, %197 : vector<8x8xi1>, vector<8x8xi32>
    %224 = arith.truncf %201 : vector<8x128xf32> to vector<8x128xbf16>
    %225 = tpu.concatenate %212, %224 in 1 : vector<8x128xbf16>, vector<8x128xbf16> -> vector<8x256xbf16>
    %cst_47 = arith.constant dense<0.000000e+00> : vector<8x128xf32>
    %226 = tpu.matmul %225, %84, %cst_47 {dimension_numbers = #tpu.dot_dimension_numbers<[1], [0], [0], [1], [0, 0, 1, 1], [], []>} : vector<8x256xbf16>, vector<256x128xbf16>, vector<8x128xf32> -> vector<8x128xf32>
    %227 = math.tanh %226 : vector<8x128xf32>
    %228 = arith.truncf %227 : vector<8x128xf32> to vector<8x128xbf16>
    %cst_48 = arith.constant dense<0.000000e+00> : vector<8x128xf32>
    %229 = tpu.matmul %228, %85, %cst_48 {dimension_numbers = #tpu.dot_dimension_numbers<[1], [0], [0], [1], [0, 0, 1, 1], [], []>} : vector<8x128xbf16>, vector<128x128xbf16>, vector<8x128xf32> -> vector<8x128xf32>
    %230 = vector.broadcast %86 : vector<1x128xf32> to vector<8x128xf32>
    %231 = arith.addf %229, %230 : vector<8x128xf32>
    %cst_49 = arith.constant dense<0xFF800000> : vector<8xf32>
    %232 = vector.multi_reduction <maximumf>, %231, %cst_49 [1] : vector<8x128xf32> to vector<8xf32>
    %233 = vector.shape_cast %232 : vector<8xf32> to vector<8x1xf32>
    %234 = vector.broadcast %233 : vector<8x1xf32> to vector<8x128xf32>
    %235 = arith.cmpf oeq, %231, %234 : vector<8x128xf32>
    %236 = arith.extui %235 : vector<8x128xi1> to vector<8x128xi32>
    %237 = arith.sitofp %236 : vector<8x128xi32> to vector<8x128xf32>
    %238 = arith.truncf %237 : vector<8x128xf32> to vector<8x128xbf16>
    %c128_i32_50 = arith.constant 128 : i32
    %239 = vector.broadcast %c128_i32_50 : i32 to vector<8x128xi32>
    %240 = arith.select %235, %0, %239 : vector<8x128xi1>, vector<8x128xi32>
    %cst_51 = arith.constant dense<2147483647> : vector<8xi32>
    %241 = vector.multi_reduction <minsi>, %240, %cst_51 [1] : vector<8x128xi32> to vector<8xi32>
    %242 = vector.shape_cast %241 : vector<8xi32> to vector<8x1xi32>
    %c127_i32_52 = arith.constant 127 : i32
    %243 = vector.broadcast %c127_i32_52 : i32 to vector<8x1xi32>
    %244 = arith.minsi %242, %243 : vector<8x1xi32>
    %c5_i32 = arith.constant 5 : i32
    %245 = vector.broadcast %c5_i32 : i32 to vector<8x8xi32>
    %246 = arith.cmpi eq, %87, %245 : vector<8x8xi32>
    %247 = vector.shape_cast %244 : vector<8x1xi32> to vector<8x1xi32>
    %248 = vector.broadcast %247 : vector<8x1xi32> to vector<8x8xi32>
    %249 = arith.select %246, %248, %223 : vector<8x8xi1>, vector<8x8xi32>
    %250 = arith.truncf %227 : vector<8x128xf32> to vector<8x128xbf16>
    %251 = tpu.concatenate %238, %250 in 1 : vector<8x128xbf16>, vector<8x128xbf16> -> vector<8x256xbf16>
    %cst_53 = arith.constant dense<0.000000e+00> : vector<8x128xf32>
    %252 = tpu.matmul %251, %84, %cst_53 {dimension_numbers = #tpu.dot_dimension_numbers<[1], [0], [0], [1], [0, 0, 1, 1], [], []>} : vector<8x256xbf16>, vector<256x128xbf16>, vector<8x128xf32> -> vector<8x128xf32>
    %253 = math.tanh %252 : vector<8x128xf32>
    %254 = arith.truncf %253 : vector<8x128xf32> to vector<8x128xbf16>
    %cst_54 = arith.constant dense<0.000000e+00> : vector<8x128xf32>
    %255 = tpu.matmul %254, %85, %cst_54 {dimension_numbers = #tpu.dot_dimension_numbers<[1], [0], [0], [1], [0, 0, 1, 1], [], []>} : vector<8x128xbf16>, vector<128x128xbf16>, vector<8x128xf32> -> vector<8x128xf32>
    %256 = vector.broadcast %86 : vector<1x128xf32> to vector<8x128xf32>
    %257 = arith.addf %255, %256 : vector<8x128xf32>
    %cst_55 = arith.constant dense<0xFF800000> : vector<8xf32>
    %258 = vector.multi_reduction <maximumf>, %257, %cst_55 [1] : vector<8x128xf32> to vector<8xf32>
    %259 = vector.shape_cast %258 : vector<8xf32> to vector<8x1xf32>
    %260 = vector.broadcast %259 : vector<8x1xf32> to vector<8x128xf32>
    %261 = arith.cmpf oeq, %257, %260 : vector<8x128xf32>
    %262 = arith.extui %261 : vector<8x128xi1> to vector<8x128xi32>
    %263 = arith.sitofp %262 : vector<8x128xi32> to vector<8x128xf32>
    %264 = arith.truncf %263 : vector<8x128xf32> to vector<8x128xbf16>
    %c128_i32_56 = arith.constant 128 : i32
    %265 = vector.broadcast %c128_i32_56 : i32 to vector<8x128xi32>
    %266 = arith.select %261, %0, %265 : vector<8x128xi1>, vector<8x128xi32>
    %cst_57 = arith.constant dense<2147483647> : vector<8xi32>
    %267 = vector.multi_reduction <minsi>, %266, %cst_57 [1] : vector<8x128xi32> to vector<8xi32>
    %268 = vector.shape_cast %267 : vector<8xi32> to vector<8x1xi32>
    %c127_i32_58 = arith.constant 127 : i32
    %269 = vector.broadcast %c127_i32_58 : i32 to vector<8x1xi32>
    %270 = arith.minsi %268, %269 : vector<8x1xi32>
    %c6_i32 = arith.constant 6 : i32
    %271 = vector.broadcast %c6_i32 : i32 to vector<8x8xi32>
    %272 = arith.cmpi eq, %87, %271 : vector<8x8xi32>
    %273 = vector.shape_cast %270 : vector<8x1xi32> to vector<8x1xi32>
    %274 = vector.broadcast %273 : vector<8x1xi32> to vector<8x8xi32>
    %275 = arith.select %272, %274, %249 : vector<8x8xi1>, vector<8x8xi32>
    %276 = arith.truncf %253 : vector<8x128xf32> to vector<8x128xbf16>
    %277 = tpu.concatenate %264, %276 in 1 : vector<8x128xbf16>, vector<8x128xbf16> -> vector<8x256xbf16>
    %cst_59 = arith.constant dense<0.000000e+00> : vector<8x128xf32>
    %278 = tpu.matmul %277, %84, %cst_59 {dimension_numbers = #tpu.dot_dimension_numbers<[1], [0], [0], [1], [0, 0, 1, 1], [], []>} : vector<8x256xbf16>, vector<256x128xbf16>, vector<8x128xf32> -> vector<8x128xf32>
    %279 = math.tanh %278 : vector<8x128xf32>
    %280 = arith.truncf %279 : vector<8x128xf32> to vector<8x128xbf16>
    %cst_60 = arith.constant dense<0.000000e+00> : vector<8x128xf32>
    %281 = tpu.matmul %280, %85, %cst_60 {dimension_numbers = #tpu.dot_dimension_numbers<[1], [0], [0], [1], [0, 0, 1, 1], [], []>} : vector<8x128xbf16>, vector<128x128xbf16>, vector<8x128xf32> -> vector<8x128xf32>
    %282 = vector.broadcast %86 : vector<1x128xf32> to vector<8x128xf32>
    %283 = arith.addf %281, %282 : vector<8x128xf32>
    %cst_61 = arith.constant dense<0xFF800000> : vector<8xf32>
    %284 = vector.multi_reduction <maximumf>, %283, %cst_61 [1] : vector<8x128xf32> to vector<8xf32>
    %285 = vector.shape_cast %284 : vector<8xf32> to vector<8x1xf32>
    %286 = vector.broadcast %285 : vector<8x1xf32> to vector<8x128xf32>
    %287 = arith.cmpf oeq, %283, %286 : vector<8x128xf32>
    %c128_i32_62 = arith.constant 128 : i32
    %288 = vector.broadcast %c128_i32_62 : i32 to vector<8x128xi32>
    %289 = arith.select %287, %0, %288 : vector<8x128xi1>, vector<8x128xi32>
    %cst_63 = arith.constant dense<2147483647> : vector<8xi32>
    %290 = vector.multi_reduction <minsi>, %289, %cst_63 [1] : vector<8x128xi32> to vector<8xi32>
    %291 = vector.shape_cast %290 : vector<8xi32> to vector<8x1xi32>
    %c127_i32_64 = arith.constant 127 : i32
    %292 = vector.broadcast %c127_i32_64 : i32 to vector<8x1xi32>
    %293 = arith.minsi %291, %292 : vector<8x1xi32>
    %c7_i32 = arith.constant 7 : i32
    %294 = vector.broadcast %c7_i32 : i32 to vector<8x8xi32>
    %295 = arith.cmpi eq, %87, %294 : vector<8x8xi32>
    %296 = vector.shape_cast %293 : vector<8x1xi32> to vector<8x1xi32>
    %297 = vector.broadcast %296 : vector<8x1xi32> to vector<8x8xi32>
    %298 = arith.select %295, %297, %275 : vector<8x8xi1>, vector<8x8xi32>
    %c0_65 = arith.constant 0 : index
    %c0_66 = arith.constant 0 : index
    %299 = vector.load %arg6[%c0_65, %c0_66] : memref<8x8xi32, #tpu.memory_space<vmem>>, vector<8x8xi32>
    tpu.vector_store %arg6[%c0_65, %c0_66], %298 {strides = array<i32>} : memref<8x8xi32, #tpu.memory_space<vmem>>, vector<8x8xi32>,
    return
  }
  func.func @transform_0(%arg0: i32) -> (i32, i32) {
    %c0_i32 = arith.constant 0 : i32
    %c0_i32_0 = arith.constant 0 : i32
    return %arg0, %c0_i32 : i32, i32
  }
  func.func @transform_1(%arg0: i32) -> (i32, i32) {
    %c0_i32 = arith.constant 0 : i32
    %c0_i32_0 = arith.constant 0 : i32
    %c0_i32_1 = arith.constant 0 : i32
    return %c0_i32, %c0_i32_0 : i32, i32
  }
  func.func @transform_2(%arg0: i32) -> (i32, i32) {
    %c0_i32 = arith.constant 0 : i32
    %c0_i32_0 = arith.constant 0 : i32
    %c0_i32_1 = arith.constant 0 : i32
    return %c0_i32, %c0_i32_0 : i32, i32
  }
  func.func @transform_3(%arg0: i32) -> (i32, i32) {
    %c0_i32 = arith.constant 0 : i32
    %c0_i32_0 = arith.constant 0 : i32
    %c0_i32_1 = arith.constant 0 : i32
    return %c0_i32, %c0_i32_0 : i32, i32
  }
  func.func @transform_4(%arg0: i32) -> (i32, i32) {
    %c0_i32 = arith.constant 0 : i32
    %c0_i32_0 = arith.constant 0 : i32
    %c0_i32_1 = arith.constant 0 : i32
    return %c0_i32, %c0_i32_0 : i32, i32
  }
  func.func @transform_5(%arg0: i32) -> (i32, i32) {
    %c0_i32 = arith.constant 0 : i32
    %c0_i32_0 = arith.constant 0 : i32
    return %arg0, %c0_i32 : i32, i32
  }
}

</mosaic_0001>

<llo_original>
// kernel: _seq2seq_predict_batched.1
$region0: #{_seq2seq_predict_batched.1}
  #allocation0 [shape = 'u32[]', space=smem, size = 0x4, offset = 0x4, fixed_abs, tag = 'smem constant byte address 0x4 - core index']
  #allocation1 [shape = 'u32[144,128]{1,0:T(1,128)}', space=vmem, size = 0x12000, scoped, tag = 'internal scratch']
  %s0 = inlined_call_operand.vmem [shape: s32[8,8], index: 0, kind: input, shape index: {}]
  %s1 = inlined_call_operand.hbm [shape: bf16[256,128], index: 1, kind: input, shape index: {}]
  %s2 = inlined_call_operand.hbm [shape: bf16[256,128], index: 2, kind: input, shape index: {}]
  %s3 = inlined_call_operand.hbm [shape: bf16[128,128], index: 3, kind: input, shape index: {}]
  %s4 = inlined_call_operand.vmem [shape: f32[1,128], index: 4, kind: input, shape index: {}]
  %s5 = inlined_call_operand.vmem [shape: s32[8,8], index: 5, kind: output, shape index: {}]
  %s6 = sld [smem:[#allocation0]]
  $region42: #{_seq2seq_predict_batched.1} parent=0
    _
  %s8 = ssub.s32 1, %s6
  %s9 = scalar_select 0, %s8, %s6
  $region1: #{_seq2seq_predict_batched.1} parent=0
    #allocation2 [shape = 'u8[65536]{0}', space=vmem, size = 0x10000, scoped, tag = 'input window, operand 1, single buffered']
    #allocation3 [shape = 's32[1]{0}', space=sflag, size = 0x4, scoped, tag = 'scoped memory for _seq2seq_predict_batched.1']
    #allocation4 [shape = 'u8[65536]{0}', space=vmem, size = 0x10000, scoped, tag = 'input window, operand 2, single buffered']
    #allocation5 [shape = 's32[1]{0}', space=sflag, size = 0x4, scoped, tag = 'scoped memory for _seq2seq_predict_batched.1']
    #allocation6 [shape = 'u8[32768]{0}', space=vmem, size = 0x8000, scoped, tag = 'input window, operand 3, single buffered']
    %10 = vsyncpa [#allocation3], 0
    %11 = vsyncpa [#allocation5], 0
    // Predicated region
    $region2: #{_seq2seq_predict_batched.1} parent=1 // pred_check
      _
    $region3: #{_seq2seq_predict_batched.1} parent=1 // pred_check_branch
      %13 = sbr.rel (0) target = $region5
    $region4: #{_seq2seq_predict_batched.1} parent=1 // pred_region
      _
    $region5: #{_seq2seq_predict_batched.1} parent=1 // pred_fallthru
      _
    // Predicated region
    $region6: #{_seq2seq_predict_batched.1} parent=1 // pred_check
      _
    $region7: #{_seq2seq_predict_batched.1} parent=1 // pred_check_branch
      %15 = sbr.rel (0) target = $region9
    $region8: #{_seq2seq_predict_batched.1} parent=1 // pred_region
      %s17 = ssub.s32 2048, 2048
      %18 = vsyncadd [#allocation3], %s17
      %s19 = sshll.u32 [#allocation2], 4
      %s20 = int_to_ptr.vmem [resolvable:$true] %s19
      %25 = dma.hbm_to_vmem [thread:$0]  %s1, 2048, %s20, [#allocation3], 64, 64, 4
    $region9: #{_seq2seq_predict_batched.1} parent=1 // pred_fallthru
      _
    // Predicated region
    $region10: #{_seq2seq_predict_batched.1} parent=1 // pred_check
      _
    $region11: #{_seq2seq_predict_batched.1} parent=1 // pred_check_branch
      %27 = sbr.rel (0) target = $region13
    $region12: #{_seq2seq_predict_batched.1} parent=1 // pred_region
      %s29 = ssub.s32 2048, 2048
      %30 = vsyncadd [#allocation5], %s29
      %s31 = sshll.u32 [#allocation4], 4
      %s32 = int_to_ptr.vmem [resolvable:$true] %s31
      %37 = dma.hbm_to_vmem [thread:$0]  %s2, 2048, %s32, [#allocation5], 64, 64, 4
    $region13: #{_seq2seq_predict_batched.1} parent=1 // pred_fallthru
      _
    // Predicated region
    $region14: #{_seq2seq_predict_batched.1} parent=1 // pred_check
      _
    $region15: #{_seq2seq_predict_batched.1} parent=1 // pred_check_branch
      %39 = sbr.rel (0) target = $region17
    $region16: #{_seq2seq_predict_batched.1} parent=1 // pred_region
      %s41 = ssub.s32 1024, 1024
      %42 = vsyncadd [#allocation5], %s41
      %s43 = sshll.u32 [#allocation6], 4
      %s44 = int_to_ptr.vmem [resolvable:$true] %s43
      %49 = dma.hbm_to_vmem [thread:$0]  %s3, 1024, %s44, [#allocation5], 64, 64, 4
    $region17: #{_seq2seq_predict_batched.1} parent=1 // pred_fallthru
      _
    // Predicated region
    $region18: #{_seq2seq_predict_batched.1} parent=1 // pred_check
      _
    $region19: #{_seq2seq_predict_batched.1} parent=1 // pred_check_branch
      %51 = sbr.rel (0) target = $region21
    $region20: #{_seq2seq_predict_batched.1} parent=1 // pred_region
      _
    $region21: #{_seq2seq_predict_batched.1} parent=1 // pred_fallthru
      _
    // Predicated region
    $region22: #{_seq2seq_predict_batched.1} parent=1 // pred_check
      _
    $region23: #{_seq2seq_predict_batched.1} parent=1 // pred_check_branch
      %53 = sbr.rel (0) target = $region25
    $region24: #{_seq2seq_predict_batched.1} parent=1 // pred_region
      %54 = dma.done [#allocation3], 2048
    $region25: #{_seq2seq_predict_batched.1} parent=1 // pred_fallthru
      _
    // Predicated region
    $region26: #{_seq2seq_predict_batched.1} parent=1 // pred_check
      _
    $region27: #{_seq2seq_predict_batched.1} parent=1 // pred_check_branch
      %56 = sbr.rel (0) target = $region29
    $region28: #{_seq2seq_predict_batched.1} parent=1 // pred_region
      %57 = dma.done [#allocation5], 2048
    $region29: #{_seq2seq_predict_batched.1} parent=1 // pred_fallthru
      _
    // Predicated region
    $region30: #{_seq2seq_predict_batched.1} parent=1 // pred_check
      _
    $region31: #{_seq2seq_predict_batched.1} parent=1 // pred_check_branch
      %59 = sbr.rel (0) target = $region33
    $region32: #{_seq2seq_predict_batched.1} parent=1 // pred_region
      %60 = dma.done [#allocation5], 1024
    $region33: #{_seq2seq_predict_batched.1} parent=1 // pred_fallthru
      _
    %v62 = vlaneseq
    %v63 = vand.u32 %v62, 127
    %v64 = vld [vmem:[%s0] sm:$0xff]
    %v65 = vld [vmem:[#allocation2] sm:$0xf]
    %v66 = vld [vmem:[#allocation2 + $0x4] sm:$0xf]
    %v67 = vld [vmem:[#allocation2 + $0x8] sm:$0xf]
    %v68 = vld [vmem:[#allocation2 + $0xc] sm:$0xf]
    %v69 = vld [vmem:[#allocation2 + $0x10] sm:$0xf]
    %v70 = vld [vmem:[#allocation2 + $0x14] sm:$0xf]
    %v71 = vld [vmem:[#allocation2 + $0x18] sm:$0xf]
    %v72 = vld [vmem:[#allocation2 + $0x1c] sm:$0xf]
    %v73 = vld [vmem:[#allocation2 + $0x20] sm:$0xf]
    %v74 = vld [vmem:[#allocation2 + $0x24] sm:$0xf]
    %v75 = vld [vmem:[#allocation2 + $0x28] sm:$0xf]
    %v76 = vld [vmem:[#allocation2 + $0x2c] sm:$0xf]
    %v77 = vld [vmem:[#allocation2 + $0x30] sm:$0xf]
    %v78 = vld [vmem:[#allocation2 + $0x34] sm:$0xf]
    %v79 = vld [vmem:[#allocation2 + $0x38] sm:$0xf]
    %v80 = vld [vmem:[#allocation2 + $0x3c] sm:$0xf]
    %v81 = vld [vmem:[#allocation2 + $0x40] sm:$0xf]
    %v82 = vld [vmem:[#allocation2 + $0x44] sm:$0xf]
    %v83 = vld [vmem:[#allocation2 + $0x48] sm:$0xf]
    %v84 = vld [vmem:[#allocation2 + $0x4c] sm:$0xf]
    %v85 = vld [vmem:[#allocation2 + $0x50] sm:$0xf]
    %v86 = vld [vmem:[#allocation2 + $0x54] sm:$0xf]
    %v87 = vld [vmem:[#allocation2 + $0x58] sm:$0xf]
    %v88 = vld [vmem:[#allocation2 + $0x5c] sm:$0xf]
    %v89 = vld [vmem:[#allocation2 + $0x60] sm:$0xf]
    %v90 = vld [vmem:[#allocation2 + $0x64] sm:$0xf]
    %v91 = vld [vmem:[#allocation2 + $0x68] sm:$0xf]
    %v92 = vld [vmem:[#allocation2 + $0x6c] sm:$0xf]
    %v93 = vld [vmem:[#allocation2 + $0x70] sm:$0xf]
    %v94 = vld [vmem:[#allocation2 + $0x74] sm:$0xf]
    %v95 = vld [vmem:[#allocation2 + $0x78] sm:$0xf]
    %v96 = vld [vmem:[#allocation2 + $0x7c] sm:$0xf]
    %97 = vset.pattern.permute.xlu0 0
    %98 = vperm.xlu0 %97, %v64
    %v99 = vpop.permute.xlu0 %98
    %vm100 = vcmp.eq.s32.totalorder %v63, %v99
    %v101 = vsel %vm100, 1, 0
    %v102 = vcvt.s32.f32 %v101
    %v103 = vpack.c.bf16 %v102, %v102
    %v136 = vunpack.c.l.b16 %v65
    %v137 = vunpack.c.l.b16 %v66
    %v138 = vunpack.c.l.b16 %v67
    %v139 = vunpack.c.l.b16 %v68
    %v140 = vunpack.c.l.b16 %v69
    %v141 = vunpack.c.l.b16 %v70
    %v142 = vunpack.c.l.b16 %v71
    %v143 = vunpack.c.l.b16 %v72
    %v144 = vunpack.c.l.b16 %v73
    %v145 = vunpack.c.l.b16 %v74
    %v146 = vunpack.c.l.b16 %v75
    %v147 = vunpack.c.l.b16 %v76
    %v148 = vunpack.c.l.b16 %v77
    %v149 = vunpack.c.l.b16 %v78
    %v150 = vunpack.c.l.b16 %v79
    %v151 = vunpack.c.l.b16 %v80
    %v152 = vunpack.c.l.b16 %v81
    %v153 = vunpack.c.l.b16 %v82
    %v154 = vunpack.c.l.b16 %v83
    %v155 = vunpack.c.l.b16 %v84
    %v156 = vunpack.c.l.b16 %v85
    %v157 = vunpack.c.l.b16 %v86
    %v158 = vunpack.c.l.b16 %v87
    %v159 = vunpack.c.l.b16 %v88
    %v160 = vunpack.c.l.b16 %v89
    %v161 = vunpack.c.l.b16 %v90
    %v162 = vunpack.c.l.b16 %v91
    %v163 = vunpack.c.l.b16 %v92
    %v164 = vunpack.c.l.b16 %v93
    %v165 = vunpack.c.l.b16 %v94
    %v166 = vunpack.c.l.b16 %v95
    %v167 = vunpack.c.l.b16 %v96
    %v168 = vpack.c.b16 %v137, %v136
    %v169 = vpack.c.b16 %v139, %v138
    %v170 = vpack.c.b16 %v141, %v140
    %v171 = vpack.c.b16 %v143, %v142
    %v172 = vpack.c.b16 %v145, %v144
    %v173 = vpack.c.b16 %v147, %v146
    %v174 = vpack.c.b16 %v149, %v148
    %v175 = vpack.c.b16 %v151, %v150
    %v176 = vpack.c.b16 %v153, %v152
    %v177 = vpack.c.b16 %v155, %v154
    %v178 = vpack.c.b16 %v157, %v156
    %v179 = vpack.c.b16 %v159, %v158
    %v180 = vpack.c.b16 %v161, %v160
    %v181 = vpack.c.b16 %v163, %v162
    %v182 = vpack.c.b16 %v165, %v164
    %v183 = vpack.c.b16 %v167, %v166
    %200 = vmatprep.subr.bf16.mxu0 0
    %201 = vmatpush1.bf16.msra.mxu0 %v168
    %202 = vmatprep.subr.bf16.mxu0 0
    %203 = vmatpush1.bf16.msra.mxu0 %v169
    %204 = vmatprep.subr.bf16.mxu0 0
    %205 = vmatpush1.bf16.msra.mxu0 %v170
    %206 = vmatprep.subr.bf16.mxu0 0
    %207 = vmatpush1.bf16.msra.mxu0 %v171
    %208 = vmatprep.subr.bf16.mxu0 0
    %209 = vmatpush1.bf16.msra.mxu0 %v172
    %210 = vmatprep.subr.bf16.mxu0 0
    %211 = vmatpush1.bf16.msra.mxu0 %v173
    %212 = vmatprep.subr.bf16.mxu0 0
    %213 = vmatpush1.bf16.msra.mxu0 %v174
    %214 = vmatprep.subr.bf16.mxu0 0
    %215 = vmatpush1.bf16.msra.mxu0 %v175
    %216 = vmatprep.subr.bf16.mxu0 0
    %217 = vmatpush1.bf16.msra.mxu0 %v176
    %218 = vmatprep.subr.bf16.mxu0 0
    %219 = vmatpush1.bf16.msra.mxu0 %v177
    %220 = vmatprep.subr.bf16.mxu0 0
    %221 = vmatpush1.bf16.msra.mxu0 %v178
    %222 = vmatprep.subr.bf16.mxu0 0
    %223 = vmatpush1.bf16.msra.mxu0 %v179
    %224 = vmatprep.subr.bf16.mxu0 0
    %225 = vmatpush1.bf16.msra.mxu0 %v180
    %226 = vmatprep.subr.bf16.mxu0 0
    %227 = vmatpush1.bf16.msra.mxu0 %v181
    %228 = vmatprep.subr.bf16.mxu0 0
    %229 = vmatpush1.bf16.msra.mxu0 %v182
    %230 = vmatprep.subr.bf16.mxu0 0
    %231 = vmatpush1.bf16.msra.mxu0 %v183
    %232 = vmatprep.mubr.bf16.mxu0 0
    %233 = vmatmul.mubr.bf16.gmra.mrb[0].mxu0 %v103
    %v234 = vpop.f32.mrb[0].mxu0
    %v235 = vadd.f32 0.0, %v234
    %v236 = vpop.f32.mrb[0].mxu0
    %v237 = vpop.f32.mrb[0].mxu0
    %v238 = vpop.f32.mrb[0].mxu0
    %239 = vdwg.mxu0
    %v240 = vtanh.pop %v235
    %241 = vset.pattern.permute.xlu0 1
    %242 = vperm.xlu0 %241, %v64
    %v243 = vpop.permute.xlu0 %242
    %vm244 = vcmp.eq.s32.totalorder %v63, %v243
    %v245 = vsel %vm244, 1, 0
    %v246 = vcvt.s32.f32 %v245
    %v247 = vpack.c.bf16 %v246, %v246
    %v248 = vpack.c.bf16 %v240, %v240
    %249 = vmatprep.subr.bf16.mxu0 0
    %250 = vmatpush1.bf16.msra.mxu0 %v168
    %251 = vmatprep.subr.bf16.mxu0 0
    %252 = vmatpush1.bf16.msra.mxu0 %v169
    %253 = vmatprep.subr.bf16.mxu0 0
    %254 = vmatpush1.bf16.msra.mxu0 %v170
    %255 = vmatprep.subr.bf16.mxu0 0
    %256 = vmatpush1.bf16.msra.mxu0 %v171
    %257 = vmatprep.subr.bf16.mxu0 0
    %258 = vmatpush1.bf16.msra.mxu0 %v172
    %259 = vmatprep.subr.bf16.mxu0 0
    %260 = vmatpush1.bf16.msra.mxu0 %v173
    %261 = vmatprep.subr.bf16.mxu0 0
    %262 = vmatpush1.bf16.msra.mxu0 %v174
    %263 = vmatprep.subr.bf16.mxu0 0
    %264 = vmatpush1.bf16.msra.mxu0 %v175
    %265 = vmatprep.subr.bf16.mxu0 0
    %266 = vmatpush1.bf16.msra.mxu0 %v176
    %267 = vmatprep.subr.bf16.mxu0 0
    %268 = vmatpush1.bf16.msra.mxu0 %v177
    %269 = vmatprep.subr.bf16.mxu0 0
    %270 = vmatpush1.bf16.msra.mxu0 %v178
    %271 = vmatprep.subr.bf16.mxu0 0
    %272 = vmatpush1.bf16.msra.mxu0 %v179
    %273 = vmatprep.subr.bf16.mxu0 0
    %274 = vmatpush1.bf16.msra.mxu0 %v180
    %275 = vmatprep.subr.bf16.mxu0 0
    %276 = vmatpush1.bf16.msra.mxu0 %v181
    %277 = vmatprep.subr.bf16.mxu0 0
    %278 = vmatpush1.bf16.msra.mxu0 %v182
    %279 = vmatprep.subr.bf16.mxu0 0
    %280 = vmatpush1.bf16.msra.mxu0 %v183
    %281 = vmatprep.mubr.bf16.mxu0 %v248
    %282 = vmatmul.mubr.bf16.gmra.mrb[0].mxu0 %v247
    %v283 = vpop.f32.mrb[0].mxu0
    %v284 = vadd.f32 0.0, %v283
    %v285 = vpop.f32.mrb[0].mxu0
    %v286 = vpop.f32.mrb[0].mxu0
    %v287 = vpop.f32.mrb[0].mxu0
    %288 = vdwg.mxu0
    %v289 = vtanh.pop %v284
    %290 = vset.pattern.permute.xlu0 2
    %291 = vperm.xlu0 %290, %v64
    %v292 = vpop.permute.xlu0 %291
    %vm293 = vcmp.eq.s32.totalorder %v63, %v292
    %v294 = vsel %vm293, 1, 0
    %v295 = vcvt.s32.f32 %v294
    %v296 = vpack.c.bf16 %v295, %v295
    %v297 = vpack.c.bf16 %v289, %v289
    %298 = vmatprep.subr.bf16.mxu0 0
    %299 = vmatpush1.bf16.msra.mxu0 %v168
    %300 = vmatprep.subr.bf16.mxu0 0
    %301 = vmatpush1.bf16.msra.mxu0 %v169
    %302 = vmatprep.subr.bf16.mxu0 0
    %303 = vmatpush1.bf16.msra.mxu0 %v170
    %304 = vmatprep.subr.bf16.mxu0 0
    %305 = vmatpush1.bf16.msra.mxu0 %v171
    %306 = vmatprep.subr.bf16.mxu0 0
    %307 = vmatpush1.bf16.msra.mxu0 %v172
    %308 = vmatprep.subr.bf16.mxu0 0
    %309 = vmatpush1.bf16.msra.mxu0 %v173
    %310 = vmatprep.subr.bf16.mxu0 0
    %311 = vmatpush1.bf16.msra.mxu0 %v174
    %312 = vmatprep.subr.bf16.mxu0 0
    %313 = vmatpush1.bf16.msra.mxu0 %v175
    %314 = vmatprep.subr.bf16.mxu0 0
    %315 = vmatpush1.bf16.msra.mxu0 %v176
    %316 = vmatprep.subr.bf16.mxu0 0
    %317 = vmatpush1.bf16.msra.mxu0 %v177
    %318 = vmatprep.subr.bf16.mxu0 0
    %319 = vmatpush1.bf16.msra.mxu0 %v178
    %320 = vmatprep.subr.bf16.mxu0 0
    %321 = vmatpush1.bf16.msra.mxu0 %v179
    %322 = vmatprep.subr.bf16.mxu0 0
    %323 = vmatpush1.bf16.msra.mxu0 %v180
    %324 = vmatprep.subr.bf16.mxu0 0
    %325 = vmatpush1.bf16.msra.mxu0 %v181
    %326 = vmatprep.subr.bf16.mxu0 0
    %327 = vmatpush1.bf16.msra.mxu0 %v182
    %328 = vmatprep.subr.bf16.mxu0 0
    %329 = vmatpush1.bf16.msra.mxu0 %v183
    %330 = vmatprep.mubr.bf16.mxu0 %v297
    %331 = vmatmul.mubr.bf16.gmra.mrb[0].mxu0 %v296
    %v332 = vpop.f32.mrb[0].mxu0
    %v333 = vadd.f32 0.0, %v332
    %v334 = vpop.f32.mrb[0].mxu0
    %v335 = vpop.f32.mrb[0].mxu0
    %v336 = vpop.f32.mrb[0].mxu0
    %337 = vdwg.mxu0
    %v338 = vtanh.pop %v333
    %339 = vset.pattern.permute.xlu0 3
    %340 = vperm.xlu0 %339, %v64
    %v341 = vpop.permute.xlu0 %340
    %vm342 = vcmp.eq.s32.totalorder %v63, %v341
    %v343 = vsel %vm342, 1, 0
    %v344 = vcvt.s32.f32 %v343
    %v345 = vpack.c.bf16 %v344, %v344
    %v346 = vpack.c.bf16 %v338, %v338
    %347 = vmatprep.subr.bf16.mxu0 0
    %348 = vmatpush1.bf16.msra.mxu0 %v168
    %349 = vmatprep.subr.bf16.mxu0 0
    %350 = vmatpush1.bf16.msra.mxu0 %v169
    %351 = vmatprep.subr.bf16.mxu0 0
    %352 = vmatpush1.bf16.msra.mxu0 %v170
    %353 = vmatprep.subr.bf16.mxu0 0
    %354 = vmatpush1.bf16.msra.mxu0 %v171
    %355 = vmatprep.subr.bf16.mxu0 0
    %356 = vmatpush1.bf16.msra.mxu0 %v172
    %357 = vmatprep.subr.bf16.mxu0 0
    %358 = vmatpush1.bf16.msra.mxu0 %v173
    %359 = vmatprep.subr.bf16.mxu0 0
    %360 = vmatpush1.bf16.msra.mxu0 %v174
    %361 = vmatprep.subr.bf16.mxu0 0
    %362 = vmatpush1.bf16.msra.mxu0 %v175
    %363 = vmatprep.subr.bf16.mxu0 0
    %364 = vmatpush1.bf16.msra.mxu0 %v176
    %365 = vmatprep.subr.bf16.mxu0 0
    %366 = vmatpush1.bf16.msra.mxu0 %v177
    %367 = vmatprep.subr.bf16.mxu0 0
    %368 = vmatpush1.bf16.msra.mxu0 %v178
    %369 = vmatprep.subr.bf16.mxu0 0
    %370 = vmatpush1.bf16.msra.mxu0 %v179
    %371 = vmatprep.subr.bf16.mxu0 0
    %372 = vmatpush1.bf16.msra.mxu0 %v180
    %373 = vmatprep.subr.bf16.mxu0 0
    %374 = vmatpush1.bf16.msra.mxu0 %v181
    %375 = vmatprep.subr.bf16.mxu0 0
    %376 = vmatpush1.bf16.msra.mxu0 %v182
    %377 = vmatprep.subr.bf16.mxu0 0
    %378 = vmatpush1.bf16.msra.mxu0 %v183
    %379 = vmatprep.mubr.bf16.mxu0 %v346
    %380 = vmatmul.mubr.bf16.gmra.mrb[0].mxu0 %v345
    %v381 = vpop.f32.mrb[0].mxu0
    %v382 = vadd.f32 0.0, %v381
    %v383 = vpop.f32.mrb[0].mxu0
    %v384 = vpop.f32.mrb[0].mxu0
    %v385 = vpop.f32.mrb[0].mxu0
    %386 = vdwg.mxu0
    %v387 = vtanh.pop %v382
    %388 = vset.pattern.permute.xlu0 4
    %389 = vperm.xlu0 %388, %v64
    %v390 = vpop.permute.xlu0 %389
    %vm391 = vcmp.eq.s32.totalorder %v63, %v390
    %v392 = vsel %vm391, 1, 0
    %v393 = vcvt.s32.f32 %v392
    %v394 = vpack.c.bf16 %v393, %v393
    %v395 = vpack.c.bf16 %v387, %v387
    %396 = vmatprep.subr.bf16.mxu0 0
    %397 = vmatpush1.bf16.msra.mxu0 %v168
    %398 = vmatprep.subr.bf16.mxu0 0
    %399 = vmatpush1.bf16.msra.mxu0 %v169
    %400 = vmatprep.subr.bf16.mxu0 0
    %401 = vmatpush1.bf16.msra.mxu0 %v170
    %402 = vmatprep.subr.bf16.mxu0 0
    %403 = vmatpush1.bf16.msra.mxu0 %v171
    %404 = vmatprep.subr.bf16.mxu0 0
    %405 = vmatpush1.bf16.msra.mxu0 %v172
    %406 = vmatprep.subr.bf16.mxu0 0
    %407 = vmatpush1.bf16.msra.mxu0 %v173
    %408 = vmatprep.subr.bf16.mxu0 0
    %409 = vmatpush1.bf16.msra.mxu0 %v174
    %410 = vmatprep.subr.bf16.mxu0 0
    %411 = vmatpush1.bf16.msra.mxu0 %v175
    %412 = vmatprep.subr.bf16.mxu0 0
    %413 = vmatpush1.bf16.msra.mxu0 %v176
    %414 = vmatprep.subr.bf16.mxu0 0
    %415 = vmatpush1.bf16.msra.mxu0 %v177
    %416 = vmatprep.subr.bf16.mxu0 0
    %417 = vmatpush1.bf16.msra.mxu0 %v178
    %418 = vmatprep.subr.bf16.mxu0 0
    %419 = vmatpush1.bf16.msra.mxu0 %v179
    %420 = vmatprep.subr.bf16.mxu0 0
    %421 = vmatpush1.bf16.msra.mxu0 %v180
    %422 = vmatprep.subr.bf16.mxu0 0
    %423 = vmatpush1.bf16.msra.mxu0 %v181
    %424 = vmatprep.subr.bf16.mxu0 0
    %425 = vmatpush1.bf16.msra.mxu0 %v182
    %426 = vmatprep.subr.bf16.mxu0 0
    %427 = vmatpush1.bf16.msra.mxu0 %v183
    %428 = vmatprep.mubr.bf16.mxu0 %v395
    %429 = vmatmul.mubr.bf16.gmra.mrb[0].mxu0 %v394
    %v430 = vpop.f32.mrb[0].mxu0
    %v431 = vadd.f32 0.0, %v430
    %v432 = vpop.f32.mrb[0].mxu0
    %v433 = vpop.f32.mrb[0].mxu0
    %v434 = vpop.f32.mrb[0].mxu0
    %435 = vdwg.mxu0
    %v436 = vtanh.pop %v431
    %437 = vset.pattern.permute.xlu0 5
    %438 = vperm.xlu0 %437, %v64
    %v439 = vpop.permute.xlu0 %438
    %vm440 = vcmp.eq.s32.totalorder %v63, %v439
    %v441 = vsel %vm440, 1, 0
    %v442 = vcvt.s32.f32 %v441
    %v443 = vpack.c.bf16 %v442, %v442
    %v444 = vpack.c.bf16 %v436, %v436
    %445 = vmatprep.subr.bf16.mxu0 0
    %446 = vmatpush1.bf16.msra.mxu0 %v168
    %447 = vmatprep.subr.bf16.mxu0 0
    %448 = vmatpush1.bf16.msra.mxu0 %v169
    %449 = vmatprep.subr.bf16.mxu0 0
    %450 = vmatpush1.bf16.msra.mxu0 %v170
    %451 = vmatprep.subr.bf16.mxu0 0
    %452 = vmatpush1.bf16.msra.mxu0 %v171
    %453 = vmatprep.subr.bf16.mxu0 0
    %454 = vmatpush1.bf16.msra.mxu0 %v172
    %455 = vmatprep.subr.bf16.mxu0 0
    %456 = vmatpush1.bf16.msra.mxu0 %v173
    %457 = vmatprep.subr.bf16.mxu0 0
    %458 = vmatpush1.bf16.msra.mxu0 %v174
    %459 = vmatprep.subr.bf16.mxu0 0
    %460 = vmatpush1.bf16.msra.mxu0 %v175
    %461 = vmatprep.subr.bf16.mxu0 0
    %462 = vmatpush1.bf16.msra.mxu0 %v176
    %463 = vmatprep.subr.bf16.mxu0 0
    %464 = vmatpush1.bf16.msra.mxu0 %v177
    %465 = vmatprep.subr.bf16.mxu0 0
    %466 = vmatpush1.bf16.msra.mxu0 %v178
    %467 = vmatprep.subr.bf16.mxu0 0
    %468 = vmatpush1.bf16.msra.mxu0 %v179
    %469 = vmatprep.subr.bf16.mxu0 0
    %470 = vmatpush1.bf16.msra.mxu0 %v180
    %471 = vmatprep.subr.bf16.mxu0 0
    %472 = vmatpush1.bf16.msra.mxu0 %v181
    %473 = vmatprep.subr.bf16.mxu0 0
    %474 = vmatpush1.bf16.msra.mxu0 %v182
    %475 = vmatprep.subr.bf16.mxu0 0
    %476 = vmatpush1.bf16.msra.mxu0 %v183
    %477 = vmatprep.mubr.bf16.mxu0 %v444
    %478 = vmatmul.mubr.bf16.gmra.mrb[0].mxu0 %v443
    %v479 = vpop.f32.mrb[0].mxu0
    %v480 = vadd.f32 0.0, %v479
    %v481 = vpop.f32.mrb[0].mxu0
    %v482 = vpop.f32.mrb[0].mxu0
    %v483 = vpop.f32.mrb[0].mxu0
    %484 = vdwg.mxu0
    %v485 = vtanh.pop %v480
    %486 = vset.pattern.permute.xlu0 6
    %487 = vperm.xlu0 %486, %v64
    %v488 = vpop.permute.xlu0 %487
    %vm489 = vcmp.eq.s32.totalorder %v63, %v488
    %v490 = vsel %vm489, 1, 0
    %v491 = vcvt.s32.f32 %v490
    %v492 = vpack.c.bf16 %v491, %v491
    %v493 = vpack.c.bf16 %v485, %v485
    %494 = vmatprep.subr.bf16.mxu0 0
    %495 = vmatpush1.bf16.msra.mxu0 %v168
    %496 = vmatprep.subr.bf16.mxu0 0
    %497 = vmatpush1.bf16.msra.mxu0 %v169
    %498 = vmatprep.subr.bf16.mxu0 0
    %499 = vmatpush1.bf16.msra.mxu0 %v170
    %500 = vmatprep.subr.bf16.mxu0 0
    %501 = vmatpush1.bf16.msra.mxu0 %v171
    %502 = vmatprep.subr.bf16.mxu0 0
    %503 = vmatpush1.bf16.msra.mxu0 %v172
    %504 = vmatprep.subr.bf16.mxu0 0
    %505 = vmatpush1.bf16.msra.mxu0 %v173
    %506 = vmatprep.subr.bf16.mxu0 0
    %507 = vmatpush1.bf16.msra.mxu0 %v174
    %508 = vmatprep.subr.bf16.mxu0 0
    %509 = vmatpush1.bf16.msra.mxu0 %v175
    %510 = vmatprep.subr.bf16.mxu0 0
    %511 = vmatpush1.bf16.msra.mxu0 %v176
    %512 = vmatprep.subr.bf16.mxu0 0
    %513 = vmatpush1.bf16.msra.mxu0 %v177
    %514 = vmatprep.subr.bf16.mxu0 0
    %515 = vmatpush1.bf16.msra.mxu0 %v178
    %516 = vmatprep.subr.bf16.mxu0 0
    %517 = vmatpush1.bf16.msra.mxu0 %v179
    %518 = vmatprep.subr.bf16.mxu0 0
    %519 = vmatpush1.bf16.msra.mxu0 %v180
    %520 = vmatprep.subr.bf16.mxu0 0
    %521 = vmatpush1.bf16.msra.mxu0 %v181
    %522 = vmatprep.subr.bf16.mxu0 0
    %523 = vmatpush1.bf16.msra.mxu0 %v182
    %524 = vmatprep.subr.bf16.mxu0 0
    %525 = vmatpush1.bf16.msra.mxu0 %v183
    %526 = vmatprep.mubr.bf16.mxu0 %v493
    %527 = vmatmul.mubr.bf16.gmra.mrb[0].mxu0 %v492
    %v528 = vpop.f32.mrb[0].mxu0
    %v529 = vadd.f32 0.0, %v528
    %v530 = vpop.f32.mrb[0].mxu0
    %v531 = vpop.f32.mrb[0].mxu0
    %v532 = vpop.f32.mrb[0].mxu0
    %533 = vdwg.mxu0
    %v534 = vtanh.pop %v529
    %535 = vset.pattern.permute.xlu0 7
    %536 = vperm.xlu0 %535, %v64
    %v537 = vpop.permute.xlu0 %536
    %vm538 = vcmp.eq.s32.totalorder %v63, %v537
    %v539 = vsel %vm538, 1, 0
    %v540 = vcvt.s32.f32 %v539
    %v541 = vpack.c.bf16 %v540, %v540
    %v542 = vpack.c.bf16 %v534, %v534
    %543 = vmatprep.subr.bf16.mxu0 0
    %544 = vmatpush1.bf16.msra.mxu0 %v168
    %545 = vmatprep.subr.bf16.mxu0 0
    %546 = vmatpush1.bf16.msra.mxu0 %v169
    %547 = vmatprep.subr.bf16.mxu0 0
    %548 = vmatpush1.bf16.msra.mxu0 %v170
    %549 = vmatprep.subr.bf16.mxu0 0
    %550 = vmatpush1.bf16.msra.mxu0 %v171
    %551 = vmatprep.subr.bf16.mxu0 0
    %552 = vmatpush1.bf16.msra.mxu0 %v172
    %553 = vmatprep.subr.bf16.mxu0 0
    %554 = vmatpush1.bf16.msra.mxu0 %v173
    %555 = vmatprep.subr.bf16.mxu0 0
    %556 = vmatpush1.bf16.msra.mxu0 %v174
    %557 = vmatprep.subr.bf16.mxu0 0
    %558 = vmatpush1.bf16.msra.mxu0 %v175
    %559 = vmatprep.subr.bf16.mxu0 0
    %560 = vmatpush1.bf16.msra.mxu0 %v176
    %561 = vmatprep.subr.bf16.mxu0 0
    %562 = vmatpush1.bf16.msra.mxu0 %v177
    %563 = vmatprep.subr.bf16.mxu0 0
    %564 = vmatpush1.bf16.msra.mxu0 %v178
    %565 = vmatprep.subr.bf16.mxu0 0
    %566 = vmatpush1.bf16.msra.mxu0 %v179
    %567 = vmatprep.subr.bf16.mxu0 0
    %568 = vmatpush1.bf16.msra.mxu0 %v180
    %569 = vmatprep.subr.bf16.mxu0 0
    %570 = vmatpush1.bf16.msra.mxu0 %v181
    %571 = vmatprep.subr.bf16.mxu0 0
    %572 = vmatpush1.bf16.msra.mxu0 %v182
    %573 = vmatprep.subr.bf16.mxu0 0
    %574 = vmatpush1.bf16.msra.mxu0 %v183
    %575 = vmatprep.mubr.bf16.mxu0 %v542
    %576 = vmatmul.mubr.bf16.gmra.mrb[0].mxu0 %v541
    %v577 = vpop.f32.mrb[0].mxu0
    %v578 = vadd.f32 0.0, %v577
    %v579 = vpop.f32.mrb[0].mxu0
    %v580 = vpop.f32.mrb[0].mxu0
    %v581 = vpop.f32.mrb[0].mxu0
    %582 = vdwg.mxu0
    %v583 = vtanh.pop %v578
    %v584 = vld [vmem:[#allocation4] sm:$0xf]
    %v585 = vld [vmem:[#allocation4 + $0x4] sm:$0xf]
    %v586 = vld [vmem:[#allocation4 + $0x8] sm:$0xf]
    %v587 = vld [vmem:[#allocation4 + $0xc] sm:$0xf]
    %v588 = vld [vmem:[#allocation4 + $0x10] sm:$0xf]
    %v589 = vld [vmem:[#allocation4 + $0x14] sm:$0xf]
    %v590 = vld [vmem:[#allocation4 + $0x18] sm:$0xf]
    %v591 = vld [vmem:[#allocation4 + $0x1c] sm:$0xf]
    %v592 = vld [vmem:[#allocation4 + $0x20] sm:$0xf]
    %v593 = vld [vmem:[#allocation4 + $0x24] sm:$0xf]
    %v594 = vld [vmem:[#allocation4 + $0x28] sm:$0xf]
    %v595 = vld [vmem:[#allocation4 + $0x2c] sm:$0xf]
    %v596 = vld [vmem:[#allocation4 + $0x30] sm:$0xf]
    %v597 = vld [vmem:[#allocation4 + $0x34] sm:$0xf]
    %v598 = vld [vmem:[#allocation4 + $0x38] sm:$0xf]
    %v599 = vld [vmem:[#allocation4 + $0x3c] sm:$0xf]
    %v600 = vld [vmem:[#allocation4 + $0x40] sm:$0xf]
    %v601 = vld [vmem:[#allocation4 + $0x44] sm:$0xf]
    %v602 = vld [vmem:[#allocation4 + $0x48] sm:$0xf]
    %v603 = vld [vmem:[#allocation4 + $0x4c] sm:$0xf]
    %v604 = vld [vmem:[#allocation4 + $0x50] sm:$0xf]
    %v605 = vld [vmem:[#allocation4 + $0x54] sm:$0xf]
    %v606 = vld [vmem:[#allocation4 + $0x58] sm:$0xf]
    %v607 = vld [vmem:[#allocation4 + $0x5c] sm:$0xf]
    %v608 = vld [vmem:[#allocation4 + $0x60] sm:$0xf]
    %v609 = vld [vmem:[#allocation4 + $0x64] sm:$0xf]
    %v610 = vld [vmem:[#allocation4 + $0x68] sm:$0xf]
    %v611 = vld [vmem:[#allocation4 + $0x6c] sm:$0xf]
    %v612 = vld [vmem:[#allocation4 + $0x70] sm:$0xf]
    %v613 = vld [vmem:[#allocation4 + $0x74] sm:$0xf]
    %v614 = vld [vmem:[#allocation4 + $0x78] sm:$0xf]
    %v615 = vld [vmem:[#allocation4 + $0x7c] sm:$0xf]
    %v616 = vld [vmem:[#allocation6] sm:$0xf]
    %v617 = vld [vmem:[#allocation6 + $0x4] sm:$0xf]
    %v618 = vld [vmem:[#allocation6 + $0x8] sm:$0xf]
    %v619 = vld [vmem:[#allocation6 + $0xc] sm:$0xf]
    %v620 = vld [vmem:[#allocation6 + $0x10] sm:$0xf]
    %v621 = vld [vmem:[#allocation6 + $0x14] sm:$0xf]
    %v622 = vld [vmem:[#allocation6 + $0x18] sm:$0xf]
    %v623 = vld [vmem:[#allocation6 + $0x1c] sm:$0xf]
    %v624 = vld [vmem:[#allocation6 + $0x20] sm:$0xf]
    %v625 = vld [vmem:[#allocation6 + $0x24] sm:$0xf]
    %v626 = vld [vmem:[#allocation6 + $0x28] sm:$0xf]
    %v627 = vld [vmem:[#allocation6 + $0x2c] sm:$0xf]
    %v628 = vld [vmem:[#allocation6 + $0x30] sm:$0xf]
    %v629 = vld [vmem:[#allocation6 + $0x34] sm:$0xf]
    %v630 = vld [vmem:[#allocation6 + $0x38] sm:$0xf]
    %v631 = vld [vmem:[#allocation6 + $0x3c] sm:$0xf]
    %v632 = vld [vmem:[%s4] sm:$0x1]
    %vm633 = vcmp.eq.s32.totalorder %v63, 1
    %v634 = vsel %vm633, 1, 0
    %v635 = vcvt.s32.f32 %v634
    %v636 = vpack.c.bf16 %v635, %v635
    %v637 = vpack.c.bf16 %v583, %v583
    %v670 = vunpack.c.l.b16 %v584
    %v671 = vunpack.c.l.b16 %v585
    %v672 = vunpack.c.l.b16 %v586
    %v673 = vunpack.c.l.b16 %v587
    %v674 = vunpack.c.l.b16 %v588
    %v675 = vunpack.c.l.b16 %v589
    %v676 = vunpack.c.l.b16 %v590
    %v677 = vunpack.c.l.b16 %v591
    %v678 = vunpack.c.l.b16 %v592
    %v679 = vunpack.c.l.b16 %v593
    %v680 = vunpack.c.l.b16 %v594
    %v681 = vunpack.c.l.b16 %v595
    %v682 = vunpack.c.l.b16 %v596
    %v683 = vunpack.c.l.b16 %v597
    %v684 = vunpack.c.l.b16 %v598
    %v685 = vunpack.c.l.b16 %v599
    %v686 = vunpack.c.l.b16 %v600
    %v687 = vunpack.c.l.b16 %v601
    %v688 = vunpack.c.l.b16 %v602
    %v689 = vunpack.c.l.b16 %v603
    %v690 = vunpack.c.l.b16 %v604
    %v691 = vunpack.c.l.b16 %v605
    %v692 = vunpack.c.l.b16 %v606
    %v693 = vunpack.c.l.b16 %v607
    %v694 = vunpack.c.l.b16 %v608
    %v695 = vunpack.c.l.b16 %v609
    %v696 = vunpack.c.l.b16 %v610
    %v697 = vunpack.c.l.b16 %v611
    %v698 = vunpack.c.l.b16 %v612
    %v699 = vunpack.c.l.b16 %v613
    %v700 = vunpack.c.l.b16 %v614
    %v701 = vunpack.c.l.b16 %v615
    %v702 = vpack.c.b16 %v671, %v670
    %v703 = vpack.c.b16 %v673, %v672
    %v704 = vpack.c.b16 %v675, %v674
    %v705 = vpack.c.b16 %v677, %v676
    %v706 = vpack.c.b16 %v679, %v678
    %v707 = vpack.c.b16 %v681, %v680
    %v708 = vpack.c.b16 %v683, %v682
    %v709 = vpack.c.b16 %v685, %v684
    %v710 = vpack.c.b16 %v687, %v686
    %v711 = vpack.c.b16 %v689, %v688
    %v712 = vpack.c.b16 %v691, %v690
    %v713 = vpack.c.b16 %v693, %v692
    %v714 = vpack.c.b16 %v695, %v694
    %v715 = vpack.c.b16 %v697, %v696
    %v716 = vpack.c.b16 %v699, %v698
    %v717 = vpack.c.b16 %v701, %v700
    %734 = vmatprep.subr.bf16.mxu0 0
    %735 = vmatpush1.bf16.msra.mxu0 %v702
    %736 = vmatprep.subr.bf16.mxu0 0
    %737 = vmatpush1.bf16.msra.mxu0 %v703
    %738 = vmatprep.subr.bf16.mxu0 0
    %739 = vmatpush1.bf16.msra.mxu0 %v704
    %740 = vmatprep.subr.bf16.mxu0 0
    %741 = vmatpush1.bf16.msra.mxu0 %v705
    %742 = vmatprep.subr.bf16.mxu0 0
    %743 = vmatpush1.bf16.msra.mxu0 %v706
    %744 = vmatprep.subr.bf16.mxu0 0
    %745 = vmatpush1.bf16.msra.mxu0 %v707
    %746 = vmatprep.subr.bf16.mxu0 0
    %747 = vmatpush1.bf16.msra.mxu0 %v708
    %748 = vmatprep.subr.bf16.mxu0 0
    %749 = vmatpush1.bf16.msra.mxu0 %v709
    %750 = vmatprep.subr.bf16.mxu0 0
    %751 = vmatpush1.bf16.msra.mxu0 %v710
    %752 = vmatprep.subr.bf16.mxu0 0
    %753 = vmatpush1.bf16.msra.mxu0 %v711
    %754 = vmatprep.subr.bf16.mxu0 0
    %755 = vmatpush1.bf16.msra.mxu0 %v712
    %756 = vmatprep.subr.bf16.mxu0 0
    %757 = vmatpush1.bf16.msra.mxu0 %v713
    %758 = vmatprep.subr.bf16.mxu0 0
    %759 = vmatpush1.bf16.msra.mxu0 %v714
    %760 = vmatprep.subr.bf16.mxu0 0
    %761 = vmatpush1.bf16.msra.mxu0 %v715
    %762 = vmatprep.subr.bf16.mxu0 0
    %763 = vmatpush1.bf16.msra.mxu0 %v716
    %764 = vmatprep.subr.bf16.mxu0 0
    %765 = vmatpush1.bf16.msra.mxu0 %v717
    %766 = vmatprep.mubr.bf16.mxu0 %v637
    %767 = vmatmul.mubr.bf16.gmra.mrb[0].mxu0 %v636
    %v768 = vpop.f32.mrb[0].mxu0
    %v769 = vadd.f32 0.0, %v768
    %v770 = vpop.f32.mrb[0].mxu0
    %v771 = vpop.f32.mrb[0].mxu0
    %v772 = vpop.f32.mrb[0].mxu0
    %773 = vdwg.mxu0
    %v774 = vtanh.pop %v769
    %v775 = vpack.c.bf16 %v774, %v774
    %v777 = vlaneseq
    %v778 = vshrl.u32 %v777, 7
    %v779 = vsub.s32 0, %v778
    %v780 = vrot.slane %v632, %v779
    %v798 = vunpack.c.l.b16 %v616
    %v799 = vunpack.c.l.b16 %v617
    %v800 = vunpack.c.l.b16 %v618
    %v801 = vunpack.c.l.b16 %v619
    %v802 = vunpack.c.l.b16 %v620
    %v803 = vunpack.c.l.b16 %v621
    %v804 = vunpack.c.l.b16 %v622
    %v805 = vunpack.c.l.b16 %v623
    %v806 = vunpack.c.l.b16 %v624
    %v807 = vunpack.c.l.b16 %v625
    %v808 = vunpack.c.l.b16 %v626
    %v809 = vunpack.c.l.b16 %v627
    %v810 = vunpack.c.l.b16 %v628
    %v811 = vunpack.c.l.b16 %v629
    %v812 = vunpack.c.l.b16 %v630
    %v813 = vunpack.c.l.b16 %v631
    %v814 = vpack.c.b16 %v799, %v798
    %v815 = vpack.c.b16 %v801, %v800
    %v816 = vpack.c.b16 %v803, %v802
    %v817 = vpack.c.b16 %v805, %v804
    %v818 = vpack.c.b16 %v807, %v806
    %v819 = vpack.c.b16 %v809, %v808
    %v820 = vpack.c.b16 %v811, %v810
    %v821 = vpack.c.b16 %v813, %v812
    %830 = vmatprep.subr.bf16.mxu0 0
    %831 = vmatpush1.bf16.msra.mxu0 %v814
    %832 = vmatprep.subr.bf16.mxu0 0
    %833 = vmatpush1.bf16.msra.mxu0 %v815
    %834 = vmatprep.subr.bf16.mxu0 0
    %835 = vmatpush1.bf16.msra.mxu0 %v816
    %836 = vmatprep.subr.bf16.mxu0 0
    %837 = vmatpush1.bf16.msra.mxu0 %v817
    %838 = vmatprep.subr.bf16.mxu0 0
    %839 = vmatpush1.bf16.msra.mxu0 %v818
    %840 = vmatprep.subr.bf16.mxu0 0
    %841 = vmatpush1.bf16.msra.mxu0 %v819
    %842 = vmatprep.subr.bf16.mxu0 0
    %843 = vmatpush1.bf16.msra.mxu0 %v820
    %844 = vmatprep.subr.bf16.mxu0 0
    %845 = vmatpush1.bf16.msra.mxu0 %v821
    %846 = vmatprep.subr.bf16.mxu0 0
    %847 = vmatpush1.bf16.msra.mxu0 0
    %848 = vmatprep.subr.bf16.mxu0 0
    %849 = vmatpush1.bf16.msra.mxu0 0
    %850 = vmatprep.subr.bf16.mxu0 0
    %851 = vmatpush1.bf16.msra.mxu0 0
    %852 = vmatprep.subr.bf16.mxu0 0
    %853 = vmatpush1.bf16.msra.mxu0 0
    %854 = vmatprep.subr.bf16.mxu0 0
    %855 = vmatpush1.bf16.msra.mxu0 0
    %856 = vmatprep.subr.bf16.mxu0 0
    %857 = vmatpush1.bf16.msra.mxu0 0
    %858 = vmatprep.subr.bf16.mxu0 0
    %859 = vmatpush1.bf16.msra.mxu0 0
    %860 = vmatprep.subr.bf16.mxu0 0
    %861 = vmatpush1.bf16.msra.mxu0 0
    %862 = vmatprep.mubr.bf16.mxu0 0
    %863 = vmatmul.mubr.bf16.gmra.mrb[0].mxu0 %v775
    %v864 = vpop.f32.mrb[0].mxu0
    %v865 = vadd.f32 %v780, %v864
    %v866 = vpop.f32.mrb[0].mxu0
    %v867 = vpop.f32.mrb[0].mxu0
    %v868 = vpop.f32.mrb[0].mxu0
    %869 = vdwg.mxu0
    %870 = vmax.xlane.f32.xlu0 %v865
    %v871 = vpop.xlane.xlu0 %870
    %vm872 = vcmp.eq.f32.partialorder %v865, %v871
    %v873 = vsel %vm872, 1, 0
    %v874 = vcvt.s32.f32 %v873
    %v875 = vpack.c.bf16 %v874, %v874
    %v876 = vsel %vm872, %v63, 128
    %v877 = vand.u32 %v876, 65535
    %v878 = vshra.s32 %v876, 16
    %v879 = vcvt.s32.f32 %v877
    %v880 = vcvt.s32.f32 %v878
    %881 = vmin.xlane.f32.xlu0 %v880
    %v882 = vpop.xlane.xlu0 %881
    %vm883 = vcmp.eq.f32.partialorder %v880, %v882
    %v884 = vsel %vm883, %v879, inf
    %885 = vmin.xlane.f32.xlu0 %v884
    %v886 = vpop.xlane.xlu0 %885
    %v887 = vcvt.f32.s32 %v886
    %v888 = vcvt.f32.s32 %v882
    %v889 = vshll.u32 %v888, 16
    %v890 = vadd.s32 %v889, %v887
    %vm891 = vcmp.lt.s32.totalorder %v890, 127
    %v892 = vsel %vm891, %v890, 127
    %vm893 = vcmp.eq.s32.totalorder %v63, 0
    %v894 = vsel %vm893, %v892, 0
    %895 = vmatprep.subr.bf16.mxu0 0
    %896 = vmatpush1.bf16.msra.mxu0 %v702
    %897 = vmatprep.subr.bf16.mxu0 0
    %898 = vmatpush1.bf16.msra.mxu0 %v703
    %899 = vmatprep.subr.bf16.mxu0 0
    %900 = vmatpush1.bf16.msra.mxu0 %v704
    %901 = vmatprep.subr.bf16.mxu0 0
    %902 = vmatpush1.bf16.msra.mxu0 %v705
    %903 = vmatprep.subr.bf16.mxu0 0
    %904 = vmatpush1.bf16.msra.mxu0 %v706
    %905 = vmatprep.subr.bf16.mxu0 0
    %906 = vmatpush1.bf16.msra.mxu0 %v707
    %907 = vmatprep.subr.bf16.mxu0 0
    %908 = vmatpush1.bf16.msra.mxu0 %v708
    %909 = vmatprep.subr.bf16.mxu0 0
    %910 = vmatpush1.bf16.msra.mxu0 %v709
    %911 = vmatprep.subr.bf16.mxu0 0
    %912 = vmatpush1.bf16.msra.mxu0 %v710
    %913 = vmatprep.subr.bf16.mxu0 0
    %914 = vmatpush1.bf16.msra.mxu0 %v711
    %915 = vmatprep.subr.bf16.mxu0 0
    %916 = vmatpush1.bf16.msra.mxu0 %v712
    %917 = vmatprep.subr.bf16.mxu0 0
    %918 = vmatpush1.bf16.msra.mxu0 %v713
    %919 = vmatprep.subr.bf16.mxu0 0
    %920 = vmatpush1.bf16.msra.mxu0 %v714
    %921 = vmatprep.subr.bf16.mxu0 0
    %922 = vmatpush1.bf16.msra.mxu0 %v715
    %923 = vmatprep.subr.bf16.mxu0 0
    %924 = vmatpush1.bf16.msra.mxu0 %v716
    %925 = vmatprep.subr.bf16.mxu0 0
    %926 = vmatpush1.bf16.msra.mxu0 %v717
    %927 = vmatprep.mubr.bf16.mxu0 %v775
    %928 = vmatmul.mubr.bf16.gmra.mrb[0].mxu0 %v875
    %v929 = vpop.f32.mrb[0].mxu0
    %v930 = vadd.f32 0.0, %v929
    %v931 = vpop.f32.mrb[0].mxu0
    %v932 = vpop.f32.mrb[0].mxu0
    %v933 = vpop.f32.mrb[0].mxu0
    %934 = vdwg.mxu0
    %v935 = vtanh.pop %v930
    %v936 = vpack.c.bf16 %v935, %v935
    %937 = vmatprep.subr.bf16.mxu0 0
    %938 = vmatpush1.bf16.msra.mxu0 %v814
    %939 = vmatprep.subr.bf16.mxu0 0
    %940 = vmatpush1.bf16.msra.mxu0 %v815
    %941 = vmatprep.subr.bf16.mxu0 0
    %942 = vmatpush1.bf16.msra.mxu0 %v816
    %943 = vmatprep.subr.bf16.mxu0 0
    %944 = vmatpush1.bf16.msra.mxu0 %v817
    %945 = vmatprep.subr.bf16.mxu0 0
    %946 = vmatpush1.bf16.msra.mxu0 %v818
    %947 = vmatprep.subr.bf16.mxu0 0
    %948 = vmatpush1.bf16.msra.mxu0 %v819
    %949 = vmatprep.subr.bf16.mxu0 0
    %950 = vmatpush1.bf16.msra.mxu0 %v820
    %951 = vmatprep.subr.bf16.mxu0 0
    %952 = vmatpush1.bf16.msra.mxu0 %v821
    %953 = vmatprep.subr.bf16.mxu0 0
    %954 = vmatpush1.bf16.msra.mxu0 0
    %955 = vmatprep.subr.bf16.mxu0 0
    %956 = vmatpush1.bf16.msra.mxu0 0
    %957 = vmatprep.subr.bf16.mxu0 0
    %958 = vmatpush1.bf16.msra.mxu0 0
    %959 = vmatprep.subr.bf16.mxu0 0
    %960 = vmatpush1.bf16.msra.mxu0 0
    %961 = vmatprep.subr.bf16.mxu0 0
    %962 = vmatpush1.bf16.msra.mxu0 0
    %963 = vmatprep.subr.bf16.mxu0 0
    %964 = vmatpush1.bf16.msra.mxu0 0
    %965 = vmatprep.subr.bf16.mxu0 0
    %966 = vmatpush1.bf16.msra.mxu0 0
    %967 = vmatprep.subr.bf16.mxu0 0
    %968 = vmatpush1.bf16.msra.mxu0 0
    %969 = vmatprep.mubr.bf16.mxu0 0
    %970 = vmatmul.mubr.bf16.gmra.mrb[0].mxu0 %v936
    %v971 = vpop.f32.mrb[0].mxu0
    %v972 = vadd.f32 %v780, %v971
    %v973 = vpop.f32.mrb[0].mxu0
    %v974 = vpop.f32.mrb[0].mxu0
    %v975 = vpop.f32.mrb[0].mxu0
    %976 = vdwg.mxu0
    %977 = vmax.xlane.f32.xlu0 %v972
    %v978 = vpop.xlane.xlu0 %977
    %vm979 = vcmp.eq.f32.partialorder %v972, %v978
    %v980 = vsel %vm979, 1, 0
    %v981 = vcvt.s32.f32 %v980
    %v982 = vpack.c.bf16 %v981, %v981
    %v983 = vsel %vm979, %v63, 128
    %v984 = vand.u32 %v983, 65535
    %v985 = vshra.s32 %v983, 16
    %v986 = vcvt.s32.f32 %v984
    %v987 = vcvt.s32.f32 %v985
    %988 = vmin.xlane.f32.xlu0 %v987
    %v989 = vpop.xlane.xlu0 %988
    %vm990 = vcmp.eq.f32.partialorder %v987, %v989
    %v991 = vsel %vm990, %v986, inf
    %992 = vmin.xlane.f32.xlu0 %v991
    %v993 = vpop.xlane.xlu0 %992
    %v994 = vcvt.f32.s32 %v993
    %v995 = vcvt.f32.s32 %v989
    %v996 = vshll.u32 %v995, 16
    %v997 = vadd.s32 %v996, %v994
    %vm998 = vcmp.lt.s32.totalorder %v997, 127
    %v999 = vsel %vm998, %v997, 127
    %v1000 = vsel %vm633, %v999, %v894
    %1001 = vmatprep.subr.bf16.mxu0 0
    %1002 = vmatpush1.bf16.msra.mxu0 %v702
    %1003 = vmatprep.subr.bf16.mxu0 0
    %1004 = vmatpush1.bf16.msra.mxu0 %v703
    %1005 = vmatprep.subr.bf16.mxu0 0
    %1006 = vmatpush1.bf16.msra.mxu0 %v704
    %1007 = vmatprep.subr.bf16.mxu0 0
    %1008 = vmatpush1.bf16.msra.mxu0 %v705
    %1009 = vmatprep.subr.bf16.mxu0 0
    %1010 = vmatpush1.bf16.msra.mxu0 %v706
    %1011 = vmatprep.subr.bf16.mxu0 0
    %1012 = vmatpush1.bf16.msra.mxu0 %v707
    %1013 = vmatprep.subr.bf16.mxu0 0
    %1014 = vmatpush1.bf16.msra.mxu0 %v708
    %1015 = vmatprep.subr.bf16.mxu0 0
    %1016 = vmatpush1.bf16.msra.mxu0 %v709
    %1017 = vmatprep.subr.bf16.mxu0 0
    %1018 = vmatpush1.bf16.msra.mxu0 %v710
    %1019 = vmatprep.subr.bf16.mxu0 0
    %1020 = vmatpush1.bf16.msra.mxu0 %v711
    %1021 = vmatprep.subr.bf16.mxu0 0
    %1022 = vmatpush1.bf16.msra.mxu0 %v712
    %1023 = vmatprep.subr.bf16.mxu0 0
    %1024 = vmatpush1.bf16.msra.mxu0 %v713
    %1025 = vmatprep.subr.bf16.mxu0 0
    %1026 = vmatpush1.bf16.msra.mxu0 %v714
    %1027 = vmatprep.subr.bf16.mxu0 0
    %1028 = vmatpush1.bf16.msra.mxu0 %v715
    %1029 = vmatprep.subr.bf16.mxu0 0
    %1030 = vmatpush1.bf16.msra.mxu0 %v716
    %1031 = vmatprep.subr.bf16.mxu0 0
    %1032 = vmatpush1.bf16.msra.mxu0 %v717
    %1033 = vmatprep.mubr.bf16.mxu0 %v936
    %1034 = vmatmul.mubr.bf16.gmra.mrb[0].mxu0 %v982
    %v1035 = vpop.f32.mrb[0].mxu0
    %v1036 = vadd.f32 0.0, %v1035
    %v1037 = vpop.f32.mrb[0].mxu0
    %v1038 = vpop.f32.mrb[0].mxu0
    %v1039 = vpop.f32.mrb[0].mxu0
    %1040 = vdwg.mxu0
    %v1041 = vtanh.pop %v1036
    %v1042 = vpack.c.bf16 %v1041, %v1041
    %1043 = vmatprep.subr.bf16.mxu0 0
    %1044 = vmatpush1.bf16.msra.mxu0 %v814
    %1045 = vmatprep.subr.bf16.mxu0 0
    %1046 = vmatpush1.bf16.msra.mxu0 %v815
    %1047 = vmatprep.subr.bf16.mxu0 0
    %1048 = vmatpush1.bf16.msra.mxu0 %v816
    %1049 = vmatprep.subr.bf16.mxu0 0
    %1050 = vmatpush1.bf16.msra.mxu0 %v817
    %1051 = vmatprep.subr.bf16.mxu0 0
    %1052 = vmatpush1.bf16.msra.mxu0 %v818
    %1053 = vmatprep.subr.bf16.mxu0 0
    %1054 = vmatpush1.bf16.msra.mxu0 %v819
    %1055 = vmatprep.subr.bf16.mxu0 0
    %1056 = vmatpush1.bf16.msra.mxu0 %v820
    %1057 = vmatprep.subr.bf16.mxu0 0
    %1058 = vmatpush1.bf16.msra.mxu0 %v821
    %1059 = vmatprep.subr.bf16.mxu0 0
    %1060 = vmatpush1.bf16.msra.mxu0 0
    %1061 = vmatprep.subr.bf16.mxu0 0
    %1062 = vmatpush1.bf16.msra.mxu0 0
    %1063 = vmatprep.subr.bf16.mxu0 0
    %1064 = vmatpush1.bf16.msra.mxu0 0
    %1065 = vmatprep.subr.bf16.mxu0 0
    %1066 = vmatpush1.bf16.msra.mxu0 0
    %1067 = vmatprep.subr.bf16.mxu0 0
    %1068 = vmatpush1.bf16.msra.mxu0 0
    %1069 = vmatprep.subr.bf16.mxu0 0
    %1070 = vmatpush1.bf16.msra.mxu0 0
    %1071 = vmatprep.subr.bf16.mxu0 0
    %1072 = vmatpush1.bf16.msra.mxu0 0
    %1073 = vmatprep.subr.bf16.mxu0 0
    %1074 = vmatpush1.bf16.msra.mxu0 0
    %1075 = vmatprep.mubr.bf16.mxu0 0
    %1076 = vmatmul.mubr.bf16.gmra.mrb[0].mxu0 %v1042
    %v1077 = vpop.f32.mrb[0].mxu0
    %v1078 = vadd.f32 %v780, %v1077
    %v1079 = vpop.f32.mrb[0].mxu0
    %v1080 = vpop.f32.mrb[0].mxu0
    %v1081 = vpop.f32.mrb[0].mxu0
    %1082 = vdwg.mxu0
    %1083 = vmax.xlane.f32.xlu0 %v1078
    %v1084 = vpop.xlane.xlu0 %1083
    %vm1085 = vcmp.eq.f32.partialorder %v1078, %v1084
    %v1086 = vsel %vm1085, 1, 0
    %v1087 = vcvt.s32.f32 %v1086
    %v1088 = vpack.c.bf16 %v1087, %v1087
    %v1089 = vsel %vm1085, %v63, 128
    %v1090 = vand.u32 %v1089, 65535
    %v1091 = vshra.s32 %v1089, 16
    %v1092 = vcvt.s32.f32 %v1090
    %v1093 = vcvt.s32.f32 %v1091
    %1094 = vmin.xlane.f32.xlu0 %v1093
    %v1095 = vpop.xlane.xlu0 %1094
    %vm1096 = vcmp.eq.f32.partialorder %v1093, %v1095
    %v1097 = vsel %vm1096, %v1092, inf
    %1098 = vmin.xlane.f32.xlu0 %v1097
    %v1099 = vpop.xlane.xlu0 %1098
    %v1100 = vcvt.f32.s32 %v1099
    %v1101 = vcvt.f32.s32 %v1095
    %v1102 = vshll.u32 %v1101, 16
    %v1103 = vadd.s32 %v1102, %v1100
    %vm1104 = vcmp.lt.s32.totalorder %v1103, 127
    %v1105 = vsel %vm1104, %v1103, 127
    %vm1106 = vcmp.eq.s32.totalorder %v63, 2
    %v1107 = vsel %vm1106, %v1105, %v1000
    %1108 = vmatprep.subr.bf16.mxu0 0
    %1109 = vmatpush1.bf16.msra.mxu0 %v702
    %1110 = vmatprep.subr.bf16.mxu0 0
    %1111 = vmatpush1.bf16.msra.mxu0 %v703
    %1112 = vmatprep.subr.bf16.mxu0 0
    %1113 = vmatpush1.bf16.msra.mxu0 %v704
    %1114 = vmatprep.subr.bf16.mxu0 0
    %1115 = vmatpush1.bf16.msra.mxu0 %v705
    %1116 = vmatprep.subr.bf16.mxu0 0
    %1117 = vmatpush1.bf16.msra.mxu0 %v706
    %1118 = vmatprep.subr.bf16.mxu0 0
    %1119 = vmatpush1.bf16.msra.mxu0 %v707
    %1120 = vmatprep.subr.bf16.mxu0 0
    %1121 = vmatpush1.bf16.msra.mxu0 %v708
    %1122 = vmatprep.subr.bf16.mxu0 0
    %1123 = vmatpush1.bf16.msra.mxu0 %v709
    %1124 = vmatprep.subr.bf16.mxu0 0
    %1125 = vmatpush1.bf16.msra.mxu0 %v710
    %1126 = vmatprep.subr.bf16.mxu0 0
    %1127 = vmatpush1.bf16.msra.mxu0 %v711
    %1128 = vmatprep.subr.bf16.mxu0 0
    %1129 = vmatpush1.bf16.msra.mxu0 %v712
    %1130 = vmatprep.subr.bf16.mxu0 0
    %1131 = vmatpush1.bf16.msra.mxu0 %v713
    %1132 = vmatprep.subr.bf16.mxu0 0
    %1133 = vmatpush1.bf16.msra.mxu0 %v714
    %1134 = vmatprep.subr.bf16.mxu0 0
    %1135 = vmatpush1.bf16.msra.mxu0 %v715
    %1136 = vmatprep.subr.bf16.mxu0 0
    %1137 = vmatpush1.bf16.msra.mxu0 %v716
    %1138 = vmatprep.subr.bf16.mxu0 0
    %1139 = vmatpush1.bf16.msra.mxu0 %v717
    %1140 = vmatprep.mubr.bf16.mxu0 %v1042
    %1141 = vmatmul.mubr.bf16.gmra.mrb[0].mxu0 %v1088
    %v1142 = vpop.f32.mrb[0].mxu0
    %v1143 = vadd.f32 0.0, %v1142
    %v1144 = vpop.f32.mrb[0].mxu0
    %v1145 = vpop.f32.mrb[0].mxu0
    %v1146 = vpop.f32.mrb[0].mxu0
    %1147 = vdwg.mxu0
    %v1148 = vtanh.pop %v1143
    %v1149 = vpack.c.bf16 %v1148, %v1148
    %1150 = vmatprep.subr.bf16.mxu0 0
    %1151 = vmatpush1.bf16.msra.mxu0 %v814
    %1152 = vmatprep.subr.bf16.mxu0 0
    %1153 = vmatpush1.bf16.msra.mxu0 %v815
    %1154 = vmatprep.subr.bf16.mxu0 0
    %1155 = vmatpush1.bf16.msra.mxu0 %v816
    %1156 = vmatprep.subr.bf16.mxu0 0
    %1157 = vmatpush1.bf16.msra.mxu0 %v817
    %1158 = vmatprep.subr.bf16.mxu0 0
    %1159 = vmatpush1.bf16.msra.mxu0 %v818
    %1160 = vmatprep.subr.bf16.mxu0 0
    %1161 = vmatpush1.bf16.msra.mxu0 %v819
    %1162 = vmatprep.subr.bf16.mxu0 0
    %1163 = vmatpush1.bf16.msra.mxu0 %v820
    %1164 = vmatprep.subr.bf16.mxu0 0
    %1165 = vmatpush1.bf16.msra.mxu0 %v821
    %1166 = vmatprep.subr.bf16.mxu0 0
    %1167 = vmatpush1.bf16.msra.mxu0 0
    %1168 = vmatprep.subr.bf16.mxu0 0
    %1169 = vmatpush1.bf16.msra.mxu0 0
    %1170 = vmatprep.subr.bf16.mxu0 0
    %1171 = vmatpush1.bf16.msra.mxu0 0
    %1172 = vmatprep.subr.bf16.mxu0 0
    %1173 = vmatpush1.bf16.msra.mxu0 0
    %1174 = vmatprep.subr.bf16.mxu0 0
    %1175 = vmatpush1.bf16.msra.mxu0 0
    %1176 = vmatprep.subr.bf16.mxu0 0
    %1177 = vmatpush1.bf16.msra.mxu0 0
    %1178 = vmatprep.subr.bf16.mxu0 0
    %1179 = vmatpush1.bf16.msra.mxu0 0
    %1180 = vmatprep.subr.bf16.mxu0 0
    %1181 = vmatpush1.bf16.msra.mxu0 0
    %1182 = vmatprep.mubr.bf16.mxu0 0
    %1183 = vmatmul.mubr.bf16.gmra.mrb[0].mxu0 %v1149
    %v1184 = vpop.f32.mrb[0].mxu0
    %v1185 = vadd.f32 %v780, %v1184
    %v1186 = vpop.f32.mrb[0].mxu0
    %v1187 = vpop.f32.mrb[0].mxu0
    %v1188 = vpop.f32.mrb[0].mxu0
    %1189 = vdwg.mxu0
    %1190 = vmax.xlane.f32.xlu0 %v1185
    %v1191 = vpop.xlane.xlu0 %1190
    %vm1192 = vcmp.eq.f32.partialorder %v1185, %v1191
    %v1193 = vsel %vm1192, 1, 0
    %v1194 = vcvt.s32.f32 %v1193
    %v1195 = vpack.c.bf16 %v1194, %v1194
    %v1196 = vsel %vm1192, %v63, 128
    %v1197 = vand.u32 %v1196, 65535
    %v1198 = vshra.s32 %v1196, 16
    %v1199 = vcvt.s32.f32 %v1197
    %v1200 = vcvt.s32.f32 %v1198
    %1201 = vmin.xlane.f32.xlu0 %v1200
    %v1202 = vpop.xlane.xlu0 %1201
    %vm1203 = vcmp.eq.f32.partialorder %v1200, %v1202
    %v1204 = vsel %vm1203, %v1199, inf
    %1205 = vmin.xlane.f32.xlu0 %v1204
    %v1206 = vpop.xlane.xlu0 %1205
    %v1207 = vcvt.f32.s32 %v1206
    %v1208 = vcvt.f32.s32 %v1202
    %v1209 = vshll.u32 %v1208, 16
    %v1210 = vadd.s32 %v1209, %v1207
    %vm1211 = vcmp.lt.s32.totalorder %v1210, 127
    %v1212 = vsel %vm1211, %v1210, 127
    %vm1213 = vcmp.eq.s32.totalorder %v63, 3
    %v1214 = vsel %vm1213, %v1212, %v1107
    %1215 = vmatprep.subr.bf16.mxu0 0
    %1216 = vmatpush1.bf16.msra.mxu0 %v702
    %1217 = vmatprep.subr.bf16.mxu0 0
    %1218 = vmatpush1.bf16.msra.mxu0 %v703
    %1219 = vmatprep.subr.bf16.mxu0 0
    %1220 = vmatpush1.bf16.msra.mxu0 %v704
    %1221 = vmatprep.subr.bf16.mxu0 0
    %1222 = vmatpush1.bf16.msra.mxu0 %v705
    %1223 = vmatprep.subr.bf16.mxu0 0
    %1224 = vmatpush1.bf16.msra.mxu0 %v706
    %1225 = vmatprep.subr.bf16.mxu0 0
    %1226 = vmatpush1.bf16.msra.mxu0 %v707
    %1227 = vmatprep.subr.bf16.mxu0 0
    %1228 = vmatpush1.bf16.msra.mxu0 %v708
    %1229 = vmatprep.subr.bf16.mxu0 0
    %1230 = vmatpush1.bf16.msra.mxu0 %v709
    %1231 = vmatprep.subr.bf16.mxu0 0
    %1232 = vmatpush1.bf16.msra.mxu0 %v710
    %1233 = vmatprep.subr.bf16.mxu0 0
    %1234 = vmatpush1.bf16.msra.mxu0 %v711
    %1235 = vmatprep.subr.bf16.mxu0 0
    %1236 = vmatpush1.bf16.msra.mxu0 %v712
    %1237 = vmatprep.subr.bf16.mxu0 0
    %1238 = vmatpush1.bf16.msra.mxu0 %v713
    %1239 = vmatprep.subr.bf16.mxu0 0
    %1240 = vmatpush1.bf16.msra.mxu0 %v714
    %1241 = vmatprep.subr.bf16.mxu0 0
    %1242 = vmatpush1.bf16.msra.mxu0 %v715
    %1243 = vmatprep.subr.bf16.mxu0 0
    %1244 = vmatpush1.bf16.msra.mxu0 %v716
    %1245 = vmatprep.subr.bf16.mxu0 0
    %1246 = vmatpush1.bf16.msra.mxu0 %v717
    %1247 = vmatprep.mubr.bf16.mxu0 %v1149
    %1248 = vmatmul.mubr.bf16.gmra.mrb[0].mxu0 %v1195
    %v1249 = vpop.f32.mrb[0].mxu0
    %v1250 = vadd.f32 0.0, %v1249
    %v1251 = vpop.f32.mrb[0].mxu0
    %v1252 = vpop.f32.mrb[0].mxu0
    %v1253 = vpop.f32.mrb[0].mxu0
    %1254 = vdwg.mxu0
    %v1255 = vtanh.pop %v1250
    %v1256 = vpack.c.bf16 %v1255, %v1255
    %1257 = vmatprep.subr.bf16.mxu0 0
    %1258 = vmatpush1.bf16.msra.mxu0 %v814
    %1259 = vmatprep.subr.bf16.mxu0 0
    %1260 = vmatpush1.bf16.msra.mxu0 %v815
    %1261 = vmatprep.subr.bf16.mxu0 0
    %1262 = vmatpush1.bf16.msra.mxu0 %v816
    %1263 = vmatprep.subr.bf16.mxu0 0
    %1264 = vmatpush1.bf16.msra.mxu0 %v817
    %1265 = vmatprep.subr.bf16.mxu0 0
    %1266 = vmatpush1.bf16.msra.mxu0 %v818
    %1267 = vmatprep.subr.bf16.mxu0 0
    %1268 = vmatpush1.bf16.msra.mxu0 %v819
    %1269 = vmatprep.subr.bf16.mxu0 0
    %1270 = vmatpush1.bf16.msra.mxu0 %v820
    %1271 = vmatprep.subr.bf16.mxu0 0
    %1272 = vmatpush1.bf16.msra.mxu0 %v821
    %1273 = vmatprep.subr.bf16.mxu0 0
    %1274 = vmatpush1.bf16.msra.mxu0 0
    %1275 = vmatprep.subr.bf16.mxu0 0
    %1276 = vmatpush1.bf16.msra.mxu0 0
    %1277 = vmatprep.subr.bf16.mxu0 0
    %1278 = vmatpush1.bf16.msra.mxu0 0
    %1279 = vmatprep.subr.bf16.mxu0 0
    %1280 = vmatpush1.bf16.msra.mxu0 0
    %1281 = vmatprep.subr.bf16.mxu0 0
    %1282 = vmatpush1.bf16.msra.mxu0 0
    %1283 = vmatprep.subr.bf16.mxu0 0
    %1284 = vmatpush1.bf16.msra.mxu0 0
    %1285 = vmatprep.subr.bf16.mxu0 0
    %1286 = vmatpush1.bf16.msra.mxu0 0
    %1287 = vmatprep.subr.bf16.mxu0 0
    %1288 = vmatpush1.bf16.msra.mxu0 0
    %1289 = vmatprep.mubr.bf16.mxu0 0
    %1290 = vmatmul.mubr.bf16.gmra.mrb[0].mxu0 %v1256
    %v1291 = vpop.f32.mrb[0].mxu0
    %v1292 = vadd.f32 %v780, %v1291
    %v1293 = vpop.f32.mrb[0].mxu0
    %v1294 = vpop.f32.mrb[0].mxu0
    %v1295 = vpop.f32.mrb[0].mxu0
    %1296 = vdwg.mxu0
    %1297 = vmax.xlane.f32.xlu0 %v1292
    %v1298 = vpop.xlane.xlu0 %1297
    %vm1299 = vcmp.eq.f32.partialorder %v1292, %v1298
    %v1300 = vsel %vm1299, 1, 0
    %v1301 = vcvt.s32.f32 %v1300
    %v1302 = vpack.c.bf16 %v1301, %v1301
    %v1303 = vsel %vm1299, %v63, 128
    %v1304 = vand.u32 %v1303, 65535
    %v1305 = vshra.s32 %v1303, 16
    %v1306 = vcvt.s32.f32 %v1304
    %v1307 = vcvt.s32.f32 %v1305
    %1308 = vmin.xlane.f32.xlu0 %v1307
    %v1309 = vpop.xlane.xlu0 %1308
    %vm1310 = vcmp.eq.f32.partialorder %v1307, %v1309
    %v1311 = vsel %vm1310, %v1306, inf
    %1312 = vmin.xlane.f32.xlu0 %v1311
    %v1313 = vpop.xlane.xlu0 %1312
    %v1314 = vcvt.f32.s32 %v1313
    %v1315 = vcvt.f32.s32 %v1309
    %v1316 = vshll.u32 %v1315, 16
    %v1317 = vadd.s32 %v1316, %v1314
    %vm1318 = vcmp.lt.s32.totalorder %v1317, 127
    %v1319 = vsel %vm1318, %v1317, 127
    %vm1320 = vcmp.eq.s32.totalorder %v63, 4
    %v1321 = vsel %vm1320, %v1319, %v1214
    %1322 = vmatprep.subr.bf16.mxu0 0
    %1323 = vmatpush1.bf16.msra.mxu0 %v702
    %1324 = vmatprep.subr.bf16.mxu0 0
    %1325 = vmatpush1.bf16.msra.mxu0 %v703
    %1326 = vmatprep.subr.bf16.mxu0 0
    %1327 = vmatpush1.bf16.msra.mxu0 %v704
    %1328 = vmatprep.subr.bf16.mxu0 0
    %1329 = vmatpush1.bf16.msra.mxu0 %v705
    %1330 = vmatprep.subr.bf16.mxu0 0
    %1331 = vmatpush1.bf16.msra.mxu0 %v706
    %1332 = vmatprep.subr.bf16.mxu0 0
    %1333 = vmatpush1.bf16.msra.mxu0 %v707
    %1334 = vmatprep.subr.bf16.mxu0 0
    %1335 = vmatpush1.bf16.msra.mxu0 %v708
    %1336 = vmatprep.subr.bf16.mxu0 0
    %1337 = vmatpush1.bf16.msra.mxu0 %v709
    %1338 = vmatprep.subr.bf16.mxu0 0
    %1339 = vmatpush1.bf16.msra.mxu0 %v710
    %1340 = vmatprep.subr.bf16.mxu0 0
    %1341 = vmatpush1.bf16.msra.mxu0 %v711
    %1342 = vmatprep.subr.bf16.mxu0 0
    %1343 = vmatpush1.bf16.msra.mxu0 %v712
    %1344 = vmatprep.subr.bf16.mxu0 0
    %1345 = vmatpush1.bf16.msra.mxu0 %v713
    %1346 = vmatprep.subr.bf16.mxu0 0
    %1347 = vmatpush1.bf16.msra.mxu0 %v714
    %1348 = vmatprep.subr.bf16.mxu0 0
    %1349 = vmatpush1.bf16.msra.mxu0 %v715
    %1350 = vmatprep.subr.bf16.mxu0 0
    %1351 = vmatpush1.bf16.msra.mxu0 %v716
    %1352 = vmatprep.subr.bf16.mxu0 0
    %1353 = vmatpush1.bf16.msra.mxu0 %v717
    %1354 = vmatprep.mubr.bf16.mxu0 %v1256
    %1355 = vmatmul.mubr.bf16.gmra.mrb[0].mxu0 %v1302
    %v1356 = vpop.f32.mrb[0].mxu0
    %v1357 = vadd.f32 0.0, %v1356
    %v1358 = vpop.f32.mrb[0].mxu0
    %v1359 = vpop.f32.mrb[0].mxu0
    %v1360 = vpop.f32.mrb[0].mxu0
    %1361 = vdwg.mxu0
    %v1362 = vtanh.pop %v1357
    %v1363 = vpack.c.bf16 %v1362, %v1362
    %1364 = vmatprep.subr.bf16.mxu0 0
    %1365 = vmatpush1.bf16.msra.mxu0 %v814
    %1366 = vmatprep.subr.bf16.mxu0 0
    %1367 = vmatpush1.bf16.msra.mxu0 %v815
    %1368 = vmatprep.subr.bf16.mxu0 0
    %1369 = vmatpush1.bf16.msra.mxu0 %v816
    %1370 = vmatprep.subr.bf16.mxu0 0
    %1371 = vmatpush1.bf16.msra.mxu0 %v817
    %1372 = vmatprep.subr.bf16.mxu0 0
    %1373 = vmatpush1.bf16.msra.mxu0 %v818
    %1374 = vmatprep.subr.bf16.mxu0 0
    %1375 = vmatpush1.bf16.msra.mxu0 %v819
    %1376 = vmatprep.subr.bf16.mxu0 0
    %1377 = vmatpush1.bf16.msra.mxu0 %v820
    %1378 = vmatprep.subr.bf16.mxu0 0
    %1379 = vmatpush1.bf16.msra.mxu0 %v821
    %1380 = vmatprep.subr.bf16.mxu0 0
    %1381 = vmatpush1.bf16.msra.mxu0 0
    %1382 = vmatprep.subr.bf16.mxu0 0
    %1383 = vmatpush1.bf16.msra.mxu0 0
    %1384 = vmatprep.subr.bf16.mxu0 0
    %1385 = vmatpush1.bf16.msra.mxu0 0
    %1386 = vmatprep.subr.bf16.mxu0 0
    %1387 = vmatpush1.bf16.msra.mxu0 0
    %1388 = vmatprep.subr.bf16.mxu0 0
    %1389 = vmatpush1.bf16.msra.mxu0 0
    %1390 = vmatprep.subr.bf16.mxu0 0
    %1391 = vmatpush1.bf16.msra.mxu0 0
    %1392 = vmatprep.subr.bf16.mxu0 0
    %1393 = vmatpush1.bf16.msra.mxu0 0
    %1394 = vmatprep.subr.bf16.mxu0 0
    %1395 = vmatpush1.bf16.msra.mxu0 0
    %1396 = vmatprep.mubr.bf16.mxu0 0
    %1397 = vmatmul.mubr.bf16.gmra.mrb[0].mxu0 %v1363
    %v1398 = vpop.f32.mrb[0].mxu0
    %v1399 = vadd.f32 %v780, %v1398
    %v1400 = vpop.f32.mrb[0].mxu0
    %v1401 = vpop.f32.mrb[0].mxu0
    %v1402 = vpop.f32.mrb[0].mxu0
    %1403 = vdwg.mxu0
    %1404 = vmax.xlane.f32.xlu0 %v1399
    %v1405 = vpop.xlane.xlu0 %1404
    %vm1406 = vcmp.eq.f32.partialorder %v1399, %v1405
    %v1407 = vsel %vm1406, 1, 0
    %v1408 = vcvt.s32.f32 %v1407
    %v1409 = vpack.c.bf16 %v1408, %v1408
    %v1410 = vsel %vm1406, %v63, 128
    %v1411 = vand.u32 %v1410, 65535
    %v1412 = vshra.s32 %v1410, 16
    %v1413 = vcvt.s32.f32 %v1411
    %v1414 = vcvt.s32.f32 %v1412
    %1415 = vmin.xlane.f32.xlu0 %v1414
    %v1416 = vpop.xlane.xlu0 %1415
    %vm1417 = vcmp.eq.f32.partialorder %v1414, %v1416
    %v1418 = vsel %vm1417, %v1413, inf
    %1419 = vmin.xlane.f32.xlu0 %v1418
    %v1420 = vpop.xlane.xlu0 %1419
    %v1421 = vcvt.f32.s32 %v1420
    %v1422 = vcvt.f32.s32 %v1416
    %v1423 = vshll.u32 %v1422, 16
    %v1424 = vadd.s32 %v1423, %v1421
    %vm1425 = vcmp.lt.s32.totalorder %v1424, 127
    %v1426 = vsel %vm1425, %v1424, 127
    %vm1427 = vcmp.eq.s32.totalorder %v63, 5
    %v1428 = vsel %vm1427, %v1426, %v1321
    %1429 = vmatprep.subr.bf16.mxu0 0
    %1430 = vmatpush1.bf16.msra.mxu0 %v702
    %1431 = vmatprep.subr.bf16.mxu0 0
    %1432 = vmatpush1.bf16.msra.mxu0 %v703
    %1433 = vmatprep.subr.bf16.mxu0 0
    %1434 = vmatpush1.bf16.msra.mxu0 %v704
    %1435 = vmatprep.subr.bf16.mxu0 0
    %1436 = vmatpush1.bf16.msra.mxu0 %v705
    %1437 = vmatprep.subr.bf16.mxu0 0
    %1438 = vmatpush1.bf16.msra.mxu0 %v706
    %1439 = vmatprep.subr.bf16.mxu0 0
    %1440 = vmatpush1.bf16.msra.mxu0 %v707
    %1441 = vmatprep.subr.bf16.mxu0 0
    %1442 = vmatpush1.bf16.msra.mxu0 %v708
    %1443 = vmatprep.subr.bf16.mxu0 0
    %1444 = vmatpush1.bf16.msra.mxu0 %v709
    %1445 = vmatprep.subr.bf16.mxu0 0
    %1446 = vmatpush1.bf16.msra.mxu0 %v710
    %1447 = vmatprep.subr.bf16.mxu0 0
    %1448 = vmatpush1.bf16.msra.mxu0 %v711
    %1449 = vmatprep.subr.bf16.mxu0 0
    %1450 = vmatpush1.bf16.msra.mxu0 %v712
    %1451 = vmatprep.subr.bf16.mxu0 0
    %1452 = vmatpush1.bf16.msra.mxu0 %v713
    %1453 = vmatprep.subr.bf16.mxu0 0
    %1454 = vmatpush1.bf16.msra.mxu0 %v714
    %1455 = vmatprep.subr.bf16.mxu0 0
    %1456 = vmatpush1.bf16.msra.mxu0 %v715
    %1457 = vmatprep.subr.bf16.mxu0 0
    %1458 = vmatpush1.bf16.msra.mxu0 %v716
    %1459 = vmatprep.subr.bf16.mxu0 0
    %1460 = vmatpush1.bf16.msra.mxu0 %v717
    %1461 = vmatprep.mubr.bf16.mxu0 %v1363
    %1462 = vmatmul.mubr.bf16.gmra.mrb[0].mxu0 %v1409
    %v1463 = vpop.f32.mrb[0].mxu0
    %v1464 = vadd.f32 0.0, %v1463
    %v1465 = vpop.f32.mrb[0].mxu0
    %v1466 = vpop.f32.mrb[0].mxu0
    %v1467 = vpop.f32.mrb[0].mxu0
    %1468 = vdwg.mxu0
    %v1469 = vtanh.pop %v1464
    %v1470 = vpack.c.bf16 %v1469, %v1469
    %1471 = vmatprep.subr.bf16.mxu0 0
    %1472 = vmatpush1.bf16.msra.mxu0 %v814
    %1473 = vmatprep.subr.bf16.mxu0 0
    %1474 = vmatpush1.bf16.msra.mxu0 %v815
    %1475 = vmatprep.subr.bf16.mxu0 0
    %1476 = vmatpush1.bf16.msra.mxu0 %v816
    %1477 = vmatprep.subr.bf16.mxu0 0
    %1478 = vmatpush1.bf16.msra.mxu0 %v817
    %1479 = vmatprep.subr.bf16.mxu0 0
    %1480 = vmatpush1.bf16.msra.mxu0 %v818
    %1481 = vmatprep.subr.bf16.mxu0 0
    %1482 = vmatpush1.bf16.msra.mxu0 %v819
    %1483 = vmatprep.subr.bf16.mxu0 0
    %1484 = vmatpush1.bf16.msra.mxu0 %v820
    %1485 = vmatprep.subr.bf16.mxu0 0
    %1486 = vmatpush1.bf16.msra.mxu0 %v821
    %1487 = vmatprep.subr.bf16.mxu0 0
    %1488 = vmatpush1.bf16.msra.mxu0 0
    %1489 = vmatprep.subr.bf16.mxu0 0
    %1490 = vmatpush1.bf16.msra.mxu0 0
    %1491 = vmatprep.subr.bf16.mxu0 0
    %1492 = vmatpush1.bf16.msra.mxu0 0
    %1493 = vmatprep.subr.bf16.mxu0 0
    %1494 = vmatpush1.bf16.msra.mxu0 0
    %1495 = vmatprep.subr.bf16.mxu0 0
    %1496 = vmatpush1.bf16.msra.mxu0 0
    %1497 = vmatprep.subr.bf16.mxu0 0
    %1498 = vmatpush1.bf16.msra.mxu0 0
    %1499 = vmatprep.subr.bf16.mxu0 0
    %1500 = vmatpush1.bf16.msra.mxu0 0
    %1501 = vmatprep.subr.bf16.mxu0 0
    %1502 = vmatpush1.bf16.msra.mxu0 0
    %1503 = vmatprep.mubr.bf16.mxu0 0
    %1504 = vmatmul.mubr.bf16.gmra.mrb[0].mxu0 %v1470
    %v1505 = vpop.f32.mrb[0].mxu0
    %v1506 = vadd.f32 %v780, %v1505
    %v1507 = vpop.f32.mrb[0].mxu0
    %v1508 = vpop.f32.mrb[0].mxu0
    %v1509 = vpop.f32.mrb[0].mxu0
    %1510 = vdwg.mxu0
    %1511 = vmax.xlane.f32.xlu0 %v1506
    %v1512 = vpop.xlane.xlu0 %1511
    %vm1513 = vcmp.eq.f32.partialorder %v1506, %v1512
    %v1514 = vsel %vm1513, 1, 0
    %v1515 = vcvt.s32.f32 %v1514
    %v1516 = vpack.c.bf16 %v1515, %v1515
    %v1517 = vsel %vm1513, %v63, 128
    %v1518 = vand.u32 %v1517, 65535
    %v1519 = vshra.s32 %v1517, 16
    %v1520 = vcvt.s32.f32 %v1518
    %v1521 = vcvt.s32.f32 %v1519
    %1522 = vmin.xlane.f32.xlu0 %v1521
    %v1523 = vpop.xlane.xlu0 %1522
    %vm1524 = vcmp.eq.f32.partialorder %v1521, %v1523
    %v1525 = vsel %vm1524, %v1520, inf
    %1526 = vmin.xlane.f32.xlu0 %v1525
    %v1527 = vpop.xlane.xlu0 %1526
    %v1528 = vcvt.f32.s32 %v1527
    %v1529 = vcvt.f32.s32 %v1523
    %v1530 = vshll.u32 %v1529, 16
    %v1531 = vadd.s32 %v1530, %v1528
    %vm1532 = vcmp.lt.s32.totalorder %v1531, 127
    %v1533 = vsel %vm1532, %v1531, 127
    %vm1534 = vcmp.eq.s32.totalorder %v63, 6
    %v1535 = vsel %vm1534, %v1533, %v1428
    %1536 = vmatprep.subr.bf16.mxu0 0
    %1537 = vmatpush1.bf16.msra.mxu0 %v702
    %1538 = vmatprep.subr.bf16.mxu0 0
    %1539 = vmatpush1.bf16.msra.mxu0 %v703
    %1540 = vmatprep.subr.bf16.mxu0 0
    %1541 = vmatpush1.bf16.msra.mxu0 %v704
    %1542 = vmatprep.subr.bf16.mxu0 0
    %1543 = vmatpush1.bf16.msra.mxu0 %v705
    %1544 = vmatprep.subr.bf16.mxu0 0
    %1545 = vmatpush1.bf16.msra.mxu0 %v706
    %1546 = vmatprep.subr.bf16.mxu0 0
    %1547 = vmatpush1.bf16.msra.mxu0 %v707
    %1548 = vmatprep.subr.bf16.mxu0 0
    %1549 = vmatpush1.bf16.msra.mxu0 %v708
    %1550 = vmatprep.subr.bf16.mxu0 0
    %1551 = vmatpush1.bf16.msra.mxu0 %v709
    %1552 = vmatprep.subr.bf16.mxu0 0
    %1553 = vmatpush1.bf16.msra.mxu0 %v710
    %1554 = vmatprep.subr.bf16.mxu0 0
    %1555 = vmatpush1.bf16.msra.mxu0 %v711
    %1556 = vmatprep.subr.bf16.mxu0 0
    %1557 = vmatpush1.bf16.msra.mxu0 %v712
    %1558 = vmatprep.subr.bf16.mxu0 0
    %1559 = vmatpush1.bf16.msra.mxu0 %v713
    %1560 = vmatprep.subr.bf16.mxu0 0
    %1561 = vmatpush1.bf16.msra.mxu0 %v714
    %1562 = vmatprep.subr.bf16.mxu0 0
    %1563 = vmatpush1.bf16.msra.mxu0 %v715
    %1564 = vmatprep.subr.bf16.mxu0 0
    %1565 = vmatpush1.bf16.msra.mxu0 %v716
    %1566 = vmatprep.subr.bf16.mxu0 0
    %1567 = vmatpush1.bf16.msra.mxu0 %v717
    %1568 = vmatprep.mubr.bf16.mxu0 %v1470
    %1569 = vmatmul.mubr.bf16.gmra.mrb[0].mxu0 %v1516
    %v1570 = vpop.f32.mrb[0].mxu0
    %v1571 = vadd.f32 0.0, %v1570
    %v1572 = vpop.f32.mrb[0].mxu0
    %v1573 = vpop.f32.mrb[0].mxu0
    %v1574 = vpop.f32.mrb[0].mxu0
    %1575 = vdwg.mxu0
    %v1576 = vtanh.pop %v1571
    %v1577 = vpack.c.bf16 %v1576, %v1576
    %1578 = vmatprep.subr.bf16.mxu0 0
    %1579 = vmatpush1.bf16.msra.mxu0 %v814
    %1580 = vmatprep.subr.bf16.mxu0 0
    %1581 = vmatpush1.bf16.msra.mxu0 %v815
    %1582 = vmatprep.subr.bf16.mxu0 0
    %1583 = vmatpush1.bf16.msra.mxu0 %v816
    %1584 = vmatprep.subr.bf16.mxu0 0
    %1585 = vmatpush1.bf16.msra.mxu0 %v817
    %1586 = vmatprep.subr.bf16.mxu0 0
    %1587 = vmatpush1.bf16.msra.mxu0 %v818
    %1588 = vmatprep.subr.bf16.mxu0 0
    %1589 = vmatpush1.bf16.msra.mxu0 %v819
    %1590 = vmatprep.subr.bf16.mxu0 0
    %1591 = vmatpush1.bf16.msra.mxu0 %v820
    %1592 = vmatprep.subr.bf16.mxu0 0
    %1593 = vmatpush1.bf16.msra.mxu0 %v821
    %1594 = vmatprep.subr.bf16.mxu0 0
    %1595 = vmatpush1.bf16.msra.mxu0 0
    %1596 = vmatprep.subr.bf16.mxu0 0
    %1597 = vmatpush1.bf16.msra.mxu0 0
    %1598 = vmatprep.subr.bf16.mxu0 0
    %1599 = vmatpush1.bf16.msra.mxu0 0
    %1600 = vmatprep.subr.bf16.mxu0 0
    %1601 = vmatpush1.bf16.msra.mxu0 0
    %1602 = vmatprep.subr.bf16.mxu0 0
    %1603 = vmatpush1.bf16.msra.mxu0 0
    %1604 = vmatprep.subr.bf16.mxu0 0
    %1605 = vmatpush1.bf16.msra.mxu0 0
    %1606 = vmatprep.subr.bf16.mxu0 0
    %1607 = vmatpush1.bf16.msra.mxu0 0
    %1608 = vmatprep.subr.bf16.mxu0 0
    %1609 = vmatpush1.bf16.msra.mxu0 0
    %1610 = vmatprep.mubr.bf16.mxu0 0
    %1611 = vmatmul.mubr.bf16.gmra.mrb[0].mxu0 %v1577
    %v1612 = vpop.f32.mrb[0].mxu0
    %v1613 = vadd.f32 %v780, %v1612
    %v1614 = vpop.f32.mrb[0].mxu0
    %v1615 = vpop.f32.mrb[0].mxu0
    %v1616 = vpop.f32.mrb[0].mxu0
    %1617 = vdwg.mxu0
    %1618 = vmax.xlane.f32.xlu0 %v1613
    %v1619 = vpop.xlane.xlu0 %1618
    %vm1620 = vcmp.eq.f32.partialorder %v1613, %v1619
    %v1621 = vsel %vm1620, %v63, 128
    %v1622 = vand.u32 %v1621, 65535
    %v1623 = vshra.s32 %v1621, 16
    %v1624 = vcvt.s32.f32 %v1622
    %v1625 = vcvt.s32.f32 %v1623
    %1626 = vmin.xlane.f32.xlu0 %v1625
    %v1627 = vpop.xlane.xlu0 %1626
    %vm1628 = vcmp.eq.f32.partialorder %v1625, %v1627
    %v1629 = vsel %vm1628, %v1624, inf
    %1630 = vmin.xlane.f32.xlu0 %v1629
    %v1631 = vpop.xlane.xlu0 %1630
    %v1632 = vcvt.f32.s32 %v1631
    %v1633 = vcvt.f32.s32 %v1627
    %v1634 = vshll.u32 %v1633, 16
    %v1635 = vadd.s32 %v1634, %v1632
    %vm1636 = vcmp.lt.s32.totalorder %v1635, 127
    %v1637 = vsel %vm1636, %v1635, 127
    %vm1638 = vcmp.eq.s32.totalorder %v63, 7
    %v1639 = vsel %vm1638, %v1637, %v1535
    %vm1640 = vcmask 64512
    %1641 = vst.msk [vmem:[%s5] sm:$0xff] %vm1640, %v1639
    // Predicated region
    $region34: #{_seq2seq_predict_batched.1} parent=1 // pred_check
      _
    $region35: #{_seq2seq_predict_batched.1} parent=1 // pred_check_branch
      %1643 = sbr.rel (0) target = $region37
    $region36: #{_seq2seq_predict_batched.1} parent=1 // pred_region
      _
    $region37: #{_seq2seq_predict_batched.1} parent=1 // pred_fallthru
      _
    // Predicated region
    $region38: #{_seq2seq_predict_batched.1} parent=1 // pred_check
      _
    $region39: #{_seq2seq_predict_batched.1} parent=1 // pred_check_branch
      %1645 = sbr.rel (0) target = $region41
    $region40: #{_seq2seq_predict_batched.1} parent=1 // pred_region
      _
    $region41: #{_seq2seq_predict_batched.1} parent=1 // pred_fallthru
      _
    %1646 = vsyncpa [#allocation3], 1
    %1647 = vsyncpa [#allocation5], 1

</llo_original>
